<compile_context>
chip_gen: v5e
topology: v5e:2x2
jax: 0.10.0
libtpu: 0.0.40
codegen_flags: <defaults>
</compile_context>

<pallas_src>
import functools

import jax
import jax.numpy as jnp
from jax.experimental import pallas as pl
from jax.experimental.pallas import tpu as pltpu

BN_EPS = 1e-5
LANE = 128


def _round_up(x, m):
    return (x + m - 1) // m * m


# ---------------------------------------------------------------------------
# Pallas kernel: fused decoder-block conv stack
#   conv3x3(no bias, BN-scale folded) + bias + ReLU
#   -> VMEM-resident padded intermediate
#   -> conv3x3(no bias, BN-scale folded) + bias + ReLU
#
# x_ref holds the spatially zero-padded (padding=1) image flattened to rows:
# flat index i*Wp + j == padded pixel (i, j).  For tap (dy, dx) the needed
# patch is the contiguous row window [dy*Wp+dx, dy*Wp+dx + H*Wp).  Rows whose
# flattened column index wraps past W are junk; they are masked to zero so
# they double as conv2's zero padding, and the wrapper slices them away.
# ---------------------------------------------------------------------------
def _decoder_block_kernel(H, W, x_ref, w1_ref, b1_ref, w2_ref, b2_ref,
                          o_ref, mid_ref):
    # x_ref:  (1, Lp, C1p)   padded+flattened conv1 input (channel-padded)
    # w1_ref: (9, C1p, C2p)  conv1 weights, tap-major, BN scale folded in
    # b1_ref: (1, C2p)       folded BN bias (beta - mean*scale), zero-padded
    # w2_ref: (9, C2p, C2p)  conv2 weights, tap-major, BN scale folded in
    # b2_ref: (1, C2p)
    # o_ref:  (1, M, C2p)    M = H*Wp rows (junk columns sliced off outside)
    # mid_ref: VMEM scratch (Lp, C2p) — padded intermediate, never hits HBM
    Wp = W + 2
    M = H * Wp
    C2 = o_ref.shape[-1]

    # mask of "real" columns (flattened column < W); wrap rows -> 0
    col = jax.lax.broadcasted_iota(jnp.int32, (M, 1), 0) % Wp
    valid = col < W

    # ---- conv1 (+BN) + ReLU: 9 full-width MXU matmuls ---------------------
    acc = jnp.zeros((M, C2), jnp.float32)
    for dy in range(3):
        for dx in range(3):
            off = dy * Wp + dx
            acc = acc + jnp.dot(x_ref[0, off:off + M, :],
                                w1_ref[dy * 3 + dx],
                                preferred_element_type=jnp.float32)
    y1 = jnp.maximum(acc + b1_ref[...], 0.0)
    y1 = jnp.where(valid, y1, 0.0)          # junk cols become conv2 zero pad

    # ---- stage spatially-padded intermediate in VMEM ----------------------
    mid_ref[...] = jnp.zeros_like(mid_ref)                  # halo rows = 0
    mid_ref[Wp + 1:Wp + 1 + M, :] = y1                      # interior+wrap pad

    # ---- conv2 (+BN) + ReLU -----------------------------------------------
    acc2 = jnp.zeros((M, C2), jnp.float32)
    for dy in range(3):
        for dx in range(3):
            off = dy * Wp + dx
            acc2 = acc2 + jnp.dot(mid_ref[off:off + M, :],
                                  w2_ref[dy * 3 + dx],
                                  preferred_element_type=jnp.float32)
    y2 = jnp.maximum(acc2 + b2_ref[...], 0.0)
    o_ref[0] = y2.astype(o_ref.dtype)        # lane-dense (C2p = 128k) store


def fused_decoder_block(xin_flat, w1, b1, w2, b2, *, H, W):
    """xin_flat: (N, Lp, C1p) padded+flattened conv1 input. Returns (N, H*Wp, C2p)."""
    N, Lp, C1p = xin_flat.shape
    C2p = w1.shape[-1]
    Wp = W + 2
    M = H * Wp
    kernel = functools.partial(_decoder_block_kernel, H, W)
    # TODO(synk): for large H/W (realistic configs), tile the spatial axis
    # (grid over row blocks with a 2-row halo) and set vmem_limit_bytes so the
    # double-buffered working set fits v7x's 32 MiB scoped VMEM.
    return pl.pallas_call(
        kernel,
        out_shape=jax.ShapeDtypeStruct((N, M, C2p), jnp.float32),
        grid=(N,),
        in_specs=[
            pl.BlockSpec((1, Lp, C1p), lambda n: (n, 0, 0)),
            pl.BlockSpec((9, C1p, C2p), lambda n: (0, 0, 0)),
            pl.BlockSpec((1, C2p), lambda n: (0, 0)),
            pl.BlockSpec((9, C2p, C2p), lambda n: (0, 0, 0)),
            pl.BlockSpec((1, C2p), lambda n: (0, 0)),
        ],
        out_specs=pl.BlockSpec((1, M, C2p), lambda n: (n, 0, 0)),
        scratch_shapes=[pltpu.VMEM((Lp, C2p), jnp.float32)],
        compiler_params=pltpu.CompilerParams(
            dimension_semantics=("parallel",)),   # batch over 2 TCs on v7x
    )(xin_flat, w1, b1, w2, b2)


# ---------------------------------------------------------------------------
# Decoder block / decoder (cheap layout glue in plain JAX, conv stack in Pallas)
# ---------------------------------------------------------------------------
def decoder_block_forward(x, skip, params):
    # x: (N, h, w, Cx) NHWC (actual channels).  skip: (N, 2h, 2w, Cs) or None.
    N, h, w, _ = x.shape
    H, W = 2 * h, 2 * w
    x = jnp.repeat(jnp.repeat(x, 2, axis=1), 2, axis=2)     # nearest 2x
    if skip is not None:
        x = jnp.concatenate([x, skip], axis=-1)              # attention1 = Id
    cin = x.shape[-1]
    c1p = params["w1"].shape[1]
    Hp, Wp = H + 2, W + 2
    L = Hp * Wp
    Lp = _round_up(L + 2, 8)    # +2: tap window may read 2 rows past L
    # spatial zero-pad (padding=1), channel pad to 128, flatten (fuses in XLA)
    xp = jnp.pad(x, ((0, 0), (1, 1), (1, 1), (0, c1p - cin)))
    xf = jnp.pad(xp.reshape(N, L, c1p), ((0, 0), (0, Lp - L), (0, 0)))

    out_flat = fused_decoder_block(xf, params["w1"], params["b1"],
                                   params["w2"], params["b2"], H=H, W=W)
    c2p = out_flat.shape[-1]
    out = out_flat.reshape(N, H, Wp, c2p)[:, :, :W, :params["oc"]]
    return out                                                # attention2 = Id


def unet_decoder_forward(feature, skips, block_params):
    d = feature                       # center = Identity
    decode = []
    for params, s in zip(block_params, skips):
        d = decoder_block_forward(d, s, params)
        decode.append(d)
    return d, decode


# ---------------------------------------------------------------------------
# Deterministic parameter init + BN-fold/pad/pack (done once, offline)
# ---------------------------------------------------------------------------
def _init_conv(key, cin, cout):
    fan_in = cin * 9
    std = (2.0 / fan_in) ** 0.5
    return jax.random.normal(key, (3, 3, cin, cout), dtype=jnp.float32) * std


def _init_bn(key, c):
    kg, kb = jax.random.split(key)
    gamma = 1.0 + 0.1 * jax.random.normal(kg, (c,), dtype=jnp.float32)
    beta = 0.1 * jax.random.normal(kb, (c,), dtype=jnp.float32)
    mean = jnp.zeros((c,), jnp.float32)   # eval-mode running stats
    var = jnp.ones((c,), jnp.float32)
    return gamma, beta, mean, var


def _prep_conv_bn(w_hwio, gamma, beta, mean, var, cin_pad, cout_pad):
    cin, cout = w_hwio.shape[2], w_hwio.shape[3]
    scale = gamma / jnp.sqrt(var + BN_EPS)
    bias = beta - mean * scale
    w = w_hwio * scale[None, None, None, :]        # fold BN scale into weights
    w = jnp.pad(w, ((0, 0), (0, 0), (0, cin_pad - cin), (0, cout_pad - cout)))
    w = w.reshape(9, cin_pad, cout_pad)            # tap-major
    b = jnp.pad(bias, (0, cout_pad - cout)).reshape(1, cout_pad)
    return w, b


def init_decoder_params(key, in_channel, skip_channel, out_channel):
    i_channel = [in_channel] + list(out_channel[:-1])
    params = []
    for i, (ic, sc, oc) in enumerate(zip(i_channel, skip_channel, out_channel)):
        k = jax.random.fold_in(key, i)
        k1, k2, k3, k4 = jax.random.split(k, 4)
        c1p = _round_up(ic + sc, LANE)
        c2p = _round_up(oc, LANE)
        w1, b1 = _prep_conv_bn(_init_conv(k1, ic + sc, oc), *_init_bn(k3, oc),
                               c1p, c2p)
        w2, b2 = _prep_conv_bn(_init_conv(k2, oc, oc), *_init_bn(k4, oc),
                               c2p, c2p)
        params.append({"w1": w1, "b1": b1, "w2": w2, "b2": b2, "oc": oc})
    return params


# ---------------------------------------------------------------------------
# Plain-XLA reference (same math) for a numerical sanity check
# ---------------------------------------------------------------------------
def _reference_block(x, skip, params):
    x = jnp.repeat(jnp.repeat(x, 2, axis=1), 2, axis=2)
    if skip is not None:
        x = jnp.concatenate([x, skip], axis=-1)
    c1p = params["w1"].shape[1]
    x = jnp.pad(x, ((0, 0), (0, 0), (0, 0), (0, c1p - x.shape[-1])))
    dn = ("NHWC", "HWIO", "NHWC")
    w1 = params["w1"].reshape(3, 3, c1p, -1)
    y = jax.lax.conv_general_dilated(x, w1, (1, 1), "SAME", dimension_numbers=dn)
    y = jnp.maximum(y + params["b1"].reshape(1, 1, 1, -1), 0.0)
    w2 = params["w2"].reshape(3, 3, y.shape[-1], -1)
    y = jax.lax.conv_general_dilated(y, w2, (1, 1), "SAME", dimension_numbers=dn)
    y = jnp.maximum(y + params["b2"].reshape(1, 1, 1, -1), 0.0)
    return y[..., :params["oc"]]


def _reference_forward(feature, skips, block_params):
    d = feature
    decode = []
    for params, s in zip(block_params, skips):
        d = _reference_block(d, s, params)
        decode.append(d)
    return d, decode


# ---------------------------------------------------------------------------
if __name__ == "__main__":
    key = jax.random.PRNGKey(0)

    # Small config: in_channel=8, skip_channel=[8, 4], out_channel=[8, 4]
    in_channel = 8
    skip_channel = [8, 4]
    out_channel = [8, 4]

    kf, ks0, ks1, kp = jax.random.split(key, 4)

    N = 2
    # feature: (N, 4, 4, 8) NHWC  (torch equivalent: (N, 8, 4, 4) NCHW)
    feature = jax.random.normal(kf, (N, 4, 4, in_channel), dtype=jnp.float32)
    skip0 = jax.random.normal(ks0, (N, 8, 8, skip_channel[0]), dtype=jnp.float32)
    skip1 = jax.random.normal(ks1, (N, 16, 16, skip_channel[1]), dtype=jnp.float32)
    skips = [skip0, skip1]

    block_params = init_decoder_params(kp, in_channel, skip_channel, out_channel)

    last, decode = unet_decoder_forward(feature, skips, block_params)
    jax.block_until_ready(last)
    for d in decode:
        jax.block_until_ready(d)

    assert last.shape == (N, 16, 16, out_channel[-1])
    assert decode[0].shape == (N, 8, 8, out_channel[0])

    # numerical check vs. plain-XLA reference (loose tol: MXU matmul precision)
    ref_last, ref_decode = _reference_forward(feature, skips, block_params)
    for got, ref in zip(decode, ref_decode):
        err = float(jnp.max(jnp.abs(got - ref)))
        assert err < 5e-2, f"max abs error too large: {err}"

    print("KERNEL_OK")
</pallas_src>

<mosaic_0001>
module attributes {stable_mosaic.version = 11 : i64} {
  func.func @_decoder_block_kernel(%arg0: i32, %arg1: memref<1x104x128xf32, #tpu.memory_space<vmem>>, %arg2: memref<9x128x128xf32, #tpu.memory_space<vmem>>, %arg3: memref<1x128xf32, #tpu.memory_space<vmem>>, %arg4: memref<9x128x128xf32, #tpu.memory_space<vmem>>, %arg5: memref<1x128xf32, #tpu.memory_space<vmem>>, %arg6: memref<1x80x128xf32, #tpu.memory_space<vmem>>, %arg7: memref<104x128xf32, #tpu.memory_space<vmem>>) attributes {dimension_semantics = [#tpu.dimension_semantics<parallel>], iteration_bounds = array<i64: 2>, scalar_prefetch = 0 : i64, scratch_operands = 1 : i64, tpu.core_type = #tpu.core_type<tc>, window_params = [{transform_indices = @transform_0, window_bounds = array<i64: 1, 104, 128>}, {pipeline_mode = #tpu.pipeline_mode<synchronous>, transform_indices = @transform_1, window_bounds = array<i64: 9, 128, 128>}, {pipeline_mode = #tpu.pipeline_mode<synchronous>, transform_indices = @transform_2, window_bounds = array<i64: 1, 128>}, {pipeline_mode = #tpu.pipeline_mode<synchronous>, transform_indices = @transform_3, window_bounds = array<i64: 9, 128, 128>}, {pipeline_mode = #tpu.pipeline_mode<synchronous>, transform_indices = @transform_4, window_bounds = array<i64: 1, 128>}, {transform_indices = @transform_5, window_bounds = array<i64: 1, 80, 128>}]} {
    %0 = tpu.iota {dimensions = array<i32: 0>} : vector<80x1xi32>
    %c10_i32 = arith.constant 10 : i32
    %c0_i32 = arith.constant 0 : i32
    %1 = arith.cmpi eq, %c10_i32, %c0_i32 : i32
    %c1_i32 = arith.constant 1 : i32
    %2 = arith.select %1, %c1_i32, %c10_i32 : i32
    %3 = vector.broadcast %2 : i32 to vector<80x1xi32>
    %4 = arith.remsi %0, %3 : vector<80x1xi32>
    %c0_i32_0 = arith.constant 0 : i32
    %5 = vector.broadcast %c0_i32_0 : i32 to vector<80x1xi32>
    %6 = arith.cmpi ne, %4, %5 : vector<80x1xi32>
    %c0_i32_1 = arith.constant 0 : i32
    %7 = vector.broadcast %c0_i32_1 : i32 to vector<80x1xi32>
    %8 = arith.cmpi slt, %4, %7 : vector<80x1xi32>
    %c0_i32_2 = arith.constant 0 : i32
    %9 = arith.cmpi slt, %2, %c0_i32_2 : i32
    %10 = vector.broadcast %9 : i1 to vector<80x1xi1>
    %11 = vector.broadcast %10 : vector<80x1xi1> to vector<80x1xi1>
    %12 = arith.xori %8, %11 : vector<80x1xi1>
    %13 = arith.andi %12, %6 : vector<80x1xi1>
    %14 = vector.broadcast %2 : i32 to vector<80x1xi32>
    %15 = arith.addi %4, %14 : vector<80x1xi32>
    %16 = arith.select %13, %15, %4 : vector<80x1xi1>, vector<80x1xi32>
    %c8_i32 = arith.constant 8 : i32
    %17 = vector.broadcast %c8_i32 : i32 to vector<80x1xi32>
    %18 = arith.cmpi slt, %16, %17 : vector<80x1xi32>
    %cst = arith.constant 0.000000e+00 : f32
    %19 = vector.broadcast %cst : f32 to vector<80x128xf32>
    %c0 = arith.constant 0 : index
    %c0_3 = arith.constant 0 : index
    %c0_4 = arith.constant 0 : index
    %20 = vector.load %arg1[%c0, %c0_3, %c0_4] : memref<1x104x128xf32, #tpu.memory_space<vmem>>, vector<1x80x128xf32>
    %21 = vector.shape_cast %20 : vector<1x80x128xf32> to vector<80x128xf32>
    %c0_5 = arith.constant 0 : index
    %c0_6 = arith.constant 0 : index
    %c0_7 = arith.constant 0 : index
    %22 = vector.load %arg2[%c0_5, %c0_6, %c0_7] : memref<9x128x128xf32, #tpu.memory_space<vmem>>, vector<1x128x128xf32>
    %23 = vector.shape_cast %22 : vector<1x128x128xf32> to vector<128x128xf32>
    %cst_8 = arith.constant dense<0.000000e+00> : vector<80x128xf32>
    %24 = tpu.matmul %21, %23, %cst_8 {dimension_numbers = #tpu.dot_dimension_numbers<[1], [0], [0], [1], [0, 0, 1, 1], [], []>} : vector<80x128xf32>, vector<128x128xf32>, vector<80x128xf32> -> vector<80x128xf32>
    %25 = arith.addf %19, %24 : vector<80x128xf32>
    %c0_9 = arith.constant 0 : index
    %c1 = arith.constant 1 : index
    %c0_10 = arith.constant 0 : index
    %26 = vector.load %arg1[%c0_9, %c1, %c0_10] : memref<1x104x128xf32, #tpu.memory_space<vmem>>, vector<1x80x128xf32>
    %27 = vector.shape_cast %26 : vector<1x80x128xf32> to vector<80x128xf32>
    %c1_11 = arith.constant 1 : index
    %c0_12 = arith.constant 0 : index
    %c0_13 = arith.constant 0 : index
    %28 = vector.load %arg2[%c1_11, %c0_12, %c0_13] : memref<9x128x128xf32, #tpu.memory_space<vmem>>, vector<1x128x128xf32>
    %29 = vector.shape_cast %28 : vector<1x128x128xf32> to vector<128x128xf32>
    %cst_14 = arith.constant dense<0.000000e+00> : vector<80x128xf32>
    %30 = tpu.matmul %27, %29, %cst_14 {dimension_numbers = #tpu.dot_dimension_numbers<[1], [0], [0], [1], [0, 0, 1, 1], [], []>} : vector<80x128xf32>, vector<128x128xf32>, vector<80x128xf32> -> vector<80x128xf32>
    %31 = arith.addf %25, %30 : vector<80x128xf32>
    %c0_15 = arith.constant 0 : index
    %c2 = arith.constant 2 : index
    %c0_16 = arith.constant 0 : index
    %32 = vector.load %arg1[%c0_15, %c2, %c0_16] : memref<1x104x128xf32, #tpu.memory_space<vmem>>, vector<1x80x128xf32>
    %33 = vector.shape_cast %32 : vector<1x80x128xf32> to vector<80x128xf32>
    %c2_17 = arith.constant 2 : index
    %c0_18 = arith.constant 0 : index
    %c0_19 = arith.constant 0 : index
    %34 = vector.load %arg2[%c2_17, %c0_18, %c0_19] : memref<9x128x128xf32, #tpu.memory_space<vmem>>, vector<1x128x128xf32>
    %35 = vector.shape_cast %34 : vector<1x128x128xf32> to vector<128x128xf32>
    %cst_20 = arith.constant dense<0.000000e+00> : vector<80x128xf32>
    %36 = tpu.matmul %33, %35, %cst_20 {dimension_numbers = #tpu.dot_dimension_numbers<[1], [0], [0], [1], [0, 0, 1, 1], [], []>} : vector<80x128xf32>, vector<128x128xf32>, vector<80x128xf32> -> vector<80x128xf32>
    %37 = arith.addf %31, %36 : vector<80x128xf32>
    %c0_21 = arith.constant 0 : index
    %c10 = arith.constant 10 : index
    %c0_22 = arith.constant 0 : index
    %38 = vector.load %arg1[%c0_21, %c10, %c0_22] : memref<1x104x128xf32, #tpu.memory_space<vmem>>, vector<1x80x128xf32>
    %39 = vector.shape_cast %38 : vector<1x80x128xf32> to vector<80x128xf32>
    %c3 = arith.constant 3 : index
    %c0_23 = arith.constant 0 : index
    %c0_24 = arith.constant 0 : index
    %40 = vector.load %arg2[%c3, %c0_23, %c0_24] : memref<9x128x128xf32, #tpu.memory_space<vmem>>, vector<1x128x128xf32>
    %41 = vector.shape_cast %40 : vector<1x128x128xf32> to vector<128x128xf32>
    %cst_25 = arith.constant dense<0.000000e+00> : vector<80x128xf32>
    %42 = tpu.matmul %39, %41, %cst_25 {dimension_numbers = #tpu.dot_dimension_numbers<[1], [0], [0], [1], [0, 0, 1, 1], [], []>} : vector<80x128xf32>, vector<128x128xf32>, vector<80x128xf32> -> vector<80x128xf32>
    %43 = arith.addf %37, %42 : vector<80x128xf32>
    %c0_26 = arith.constant 0 : index
    %c11 = arith.constant 11 : index
    %c0_27 = arith.constant 0 : index
    %44 = vector.load %arg1[%c0_26, %c11, %c0_27] : memref<1x104x128xf32, #tpu.memory_space<vmem>>, vector<1x80x128xf32>
    %45 = vector.shape_cast %44 : vector<1x80x128xf32> to vector<80x128xf32>
    %c4 = arith.constant 4 : index
    %c0_28 = arith.constant 0 : index
    %c0_29 = arith.constant 0 : index
    %46 = vector.load %arg2[%c4, %c0_28, %c0_29] : memref<9x128x128xf32, #tpu.memory_space<vmem>>, vector<1x128x128xf32>
    %47 = vector.shape_cast %46 : vector<1x128x128xf32> to vector<128x128xf32>
    %cst_30 = arith.constant dense<0.000000e+00> : vector<80x128xf32>
    %48 = tpu.matmul %45, %47, %cst_30 {dimension_numbers = #tpu.dot_dimension_numbers<[1], [0], [0], [1], [0, 0, 1, 1], [], []>} : vector<80x128xf32>, vector<128x128xf32>, vector<80x128xf32> -> vector<80x128xf32>
    %49 = arith.addf %43, %48 : vector<80x128xf32>
    %c0_31 = arith.constant 0 : index
    %c12 = arith.constant 12 : index
    %c0_32 = arith.constant 0 : index
    %50 = vector.load %arg1[%c0_31, %c12, %c0_32] : memref<1x104x128xf32, #tpu.memory_space<vmem>>, vector<1x80x128xf32>
    %51 = vector.shape_cast %50 : vector<1x80x128xf32> to vector<80x128xf32>
    %c5 = arith.constant 5 : index
    %c0_33 = arith.constant 0 : index
    %c0_34 = arith.constant 0 : index
    %52 = vector.load %arg2[%c5, %c0_33, %c0_34] : memref<9x128x128xf32, #tpu.memory_space<vmem>>, vector<1x128x128xf32>
    %53 = vector.shape_cast %52 : vector<1x128x128xf32> to vector<128x128xf32>
    %cst_35 = arith.constant dense<0.000000e+00> : vector<80x128xf32>
    %54 = tpu.matmul %51, %53, %cst_35 {dimension_numbers = #tpu.dot_dimension_numbers<[1], [0], [0], [1], [0, 0, 1, 1], [], []>} : vector<80x128xf32>, vector<128x128xf32>, vector<80x128xf32> -> vector<80x128xf32>
    %55 = arith.addf %49, %54 : vector<80x128xf32>
    %c0_36 = arith.constant 0 : index
    %c20 = arith.constant 20 : index
    %c0_37 = arith.constant 0 : index
    %56 = vector.load %arg1[%c0_36, %c20, %c0_37] : memref<1x104x128xf32, #tpu.memory_space<vmem>>, vector<1x80x128xf32>
    %57 = vector.shape_cast %56 : vector<1x80x128xf32> to vector<80x128xf32>
    %c6 = arith.constant 6 : index
    %c0_38 = arith.constant 0 : index
    %c0_39 = arith.constant 0 : index
    %58 = vector.load %arg2[%c6, %c0_38, %c0_39] : memref<9x128x128xf32, #tpu.memory_space<vmem>>, vector<1x128x128xf32>
    %59 = vector.shape_cast %58 : vector<1x128x128xf32> to vector<128x128xf32>
    %cst_40 = arith.constant dense<0.000000e+00> : vector<80x128xf32>
    %60 = tpu.matmul %57, %59, %cst_40 {dimension_numbers = #tpu.dot_dimension_numbers<[1], [0], [0], [1], [0, 0, 1, 1], [], []>} : vector<80x128xf32>, vector<128x128xf32>, vector<80x128xf32> -> vector<80x128xf32>
    %61 = arith.addf %55, %60 : vector<80x128xf32>
    %c0_41 = arith.constant 0 : index
    %c21 = arith.constant 21 : index
    %c0_42 = arith.constant 0 : index
    %62 = vector.load %arg1[%c0_41, %c21, %c0_42] : memref<1x104x128xf32, #tpu.memory_space<vmem>>, vector<1x80x128xf32>
    %63 = vector.shape_cast %62 : vector<1x80x128xf32> to vector<80x128xf32>
    %c7 = arith.constant 7 : index
    %c0_43 = arith.constant 0 : index
    %c0_44 = arith.constant 0 : index
    %64 = vector.load %arg2[%c7, %c0_43, %c0_44] : memref<9x128x128xf32, #tpu.memory_space<vmem>>, vector<1x128x128xf32>
    %65 = vector.shape_cast %64 : vector<1x128x128xf32> to vector<128x128xf32>
    %cst_45 = arith.constant dense<0.000000e+00> : vector<80x128xf32>
    %66 = tpu.matmul %63, %65, %cst_45 {dimension_numbers = #tpu.dot_dimension_numbers<[1], [0], [0], [1], [0, 0, 1, 1], [], []>} : vector<80x128xf32>, vector<128x128xf32>, vector<80x128xf32> -> vector<80x128xf32>
    %67 = arith.addf %61, %66 : vector<80x128xf32>
    %c0_46 = arith.constant 0 : index
    %c22 = arith.constant 22 : index
    %c0_47 = arith.constant 0 : index
    %68 = vector.load %arg1[%c0_46, %c22, %c0_47] : memref<1x104x128xf32, #tpu.memory_space<vmem>>, vector<1x80x128xf32>
    %69 = vector.shape_cast %68 : vector<1x80x128xf32> to vector<80x128xf32>
    %c8 = arith.constant 8 : index
    %c0_48 = arith.constant 0 : index
    %c0_49 = arith.constant 0 : index
    %70 = vector.load %arg2[%c8, %c0_48, %c0_49] : memref<9x128x128xf32, #tpu.memory_space<vmem>>, vector<1x128x128xf32>
    %71 = vector.shape_cast %70 : vector<1x128x128xf32> to vector<128x128xf32>
    %cst_50 = arith.constant dense<0.000000e+00> : vector<80x128xf32>
    %72 = tpu.matmul %69, %71, %cst_50 {dimension_numbers = #tpu.dot_dimension_numbers<[1], [0], [0], [1], [0, 0, 1, 1], [], []>} : vector<80x128xf32>, vector<128x128xf32>, vector<80x128xf32> -> vector<80x128xf32>
    %73 = arith.addf %67, %72 : vector<80x128xf32>
    %c0_51 = arith.constant 0 : index
    %c0_52 = arith.constant 0 : index
    %74 = vector.load %arg3[%c0_51, %c0_52] : memref<1x128xf32, #tpu.memory_space<vmem>>, vector<1x128xf32>
    %75 = vector.broadcast %74 : vector<1x128xf32> to vector<80x128xf32>
    %76 = arith.addf %73, %75 : vector<80x128xf32>
    %cst_53 = arith.constant 0.000000e+00 : f32
    %77 = vector.broadcast %cst_53 : f32 to vector<80x128xf32>
    %78 = arith.maximumf %76, %77 : vector<80x128xf32>
    %cst_54 = arith.constant 0.000000e+00 : f32
    %79 = vector.shape_cast %18 : vector<80x1xi1> to vector<80x1xi1>
    %80 = vector.broadcast %79 : vector<80x1xi1> to vector<80x128xi1>
    %81 = vector.broadcast %cst_54 : f32 to vector<80x128xf32>
    %82 = arith.select %80, %78, %81 : vector<80x128xi1>, vector<80x128xf32>
    %cst_55 = arith.constant 0.000000e+00 : f32
    %83 = vector.broadcast %cst_55 : f32 to vector<104x128xf32>
    %c0_56 = arith.constant 0 : index
    %c0_57 = arith.constant 0 : index
    %84 = vector.load %arg7[%c0_56, %c0_57] : memref<104x128xf32, #tpu.memory_space<vmem>>, vector<104x128xf32>
    tpu.vector_store %arg7[%c0_56, %c0_57], %83 {strides = array<i32>} : memref<104x128xf32, #tpu.memory_space<vmem>>, vector<104x128xf32>,
    %c11_58 = arith.constant 11 : index
    %c0_59 = arith.constant 0 : index
    %85 = vector.load %arg7[%c11_58, %c0_59] : memref<104x128xf32, #tpu.memory_space<vmem>>, vector<80x128xf32>
    tpu.vector_store %arg7[%c11_58, %c0_59], %82 {strides = array<i32>} : memref<104x128xf32, #tpu.memory_space<vmem>>, vector<80x128xf32>,
    %cst_60 = arith.constant 0.000000e+00 : f32
    %86 = vector.broadcast %cst_60 : f32 to vector<80x128xf32>
    %c0_61 = arith.constant 0 : index
    %c0_62 = arith.constant 0 : index
    %87 = vector.load %arg7[%c0_61, %c0_62] : memref<104x128xf32, #tpu.memory_space<vmem>>, vector<80x128xf32>
    %c0_63 = arith.constant 0 : index
    %c0_64 = arith.constant 0 : index
    %c0_65 = arith.constant 0 : index
    %88 = vector.load %arg4[%c0_63, %c0_64, %c0_65] : memref<9x128x128xf32, #tpu.memory_space<vmem>>, vector<1x128x128xf32>
    %89 = vector.shape_cast %88 : vector<1x128x128xf32> to vector<128x128xf32>
    %cst_66 = arith.constant dense<0.000000e+00> : vector<80x128xf32>
    %90 = tpu.matmul %87, %89, %cst_66 {dimension_numbers = #tpu.dot_dimension_numbers<[1], [0], [0], [1], [0, 0, 1, 1], [], []>} : vector<80x128xf32>, vector<128x128xf32>, vector<80x128xf32> -> vector<80x128xf32>
    %91 = arith.addf %86, %90 : vector<80x128xf32>
    %c1_67 = arith.constant 1 : index
    %c0_68 = arith.constant 0 : index
    %92 = vector.load %arg7[%c1_67, %c0_68] : memref<104x128xf32, #tpu.memory_space<vmem>>, vector<80x128xf32>
    %c1_69 = arith.constant 1 : index
    %c0_70 = arith.constant 0 : index
    %c0_71 = arith.constant 0 : index
    %93 = vector.load %arg4[%c1_69, %c0_70, %c0_71] : memref<9x128x128xf32, #tpu.memory_space<vmem>>, vector<1x128x128xf32>
    %94 = vector.shape_cast %93 : vector<1x128x128xf32> to vector<128x128xf32>
    %cst_72 = arith.constant dense<0.000000e+00> : vector<80x128xf32>
    %95 = tpu.matmul %92, %94, %cst_72 {dimension_numbers = #tpu.dot_dimension_numbers<[1], [0], [0], [1], [0, 0, 1, 1], [], []>} : vector<80x128xf32>, vector<128x128xf32>, vector<80x128xf32> -> vector<80x128xf32>
    %96 = arith.addf %91, %95 : vector<80x128xf32>
    %c2_73 = arith.constant 2 : index
    %c0_74 = arith.constant 0 : index
    %97 = vector.load %arg7[%c2_73, %c0_74] : memref<104x128xf32, #tpu.memory_space<vmem>>, vector<80x128xf32>
    %c2_75 = arith.constant 2 : index
    %c0_76 = arith.constant 0 : index
    %c0_77 = arith.constant 0 : index
    %98 = vector.load %arg4[%c2_75, %c0_76, %c0_77] : memref<9x128x128xf32, #tpu.memory_space<vmem>>, vector<1x128x128xf32>
    %99 = vector.shape_cast %98 : vector<1x128x128xf32> to vector<128x128xf32>
    %cst_78 = arith.constant dense<0.000000e+00> : vector<80x128xf32>
    %100 = tpu.matmul %97, %99, %cst_78 {dimension_numbers = #tpu.dot_dimension_numbers<[1], [0], [0], [1], [0, 0, 1, 1], [], []>} : vector<80x128xf32>, vector<128x128xf32>, vector<80x128xf32> -> vector<80x128xf32>
    %101 = arith.addf %96, %100 : vector<80x128xf32>
    %c10_79 = arith.constant 10 : index
    %c0_80 = arith.constant 0 : index
    %102 = vector.load %arg7[%c10_79, %c0_80] : memref<104x128xf32, #tpu.memory_space<vmem>>, vector<80x128xf32>
    %c3_81 = arith.constant 3 : index
    %c0_82 = arith.constant 0 : index
    %c0_83 = arith.constant 0 : index
    %103 = vector.load %arg4[%c3_81, %c0_82, %c0_83] : memref<9x128x128xf32, #tpu.memory_space<vmem>>, vector<1x128x128xf32>
    %104 = vector.shape_cast %103 : vector<1x128x128xf32> to vector<128x128xf32>
    %cst_84 = arith.constant dense<0.000000e+00> : vector<80x128xf32>
    %105 = tpu.matmul %102, %104, %cst_84 {dimension_numbers = #tpu.dot_dimension_numbers<[1], [0], [0], [1], [0, 0, 1, 1], [], []>} : vector<80x128xf32>, vector<128x128xf32>, vector<80x128xf32> -> vector<80x128xf32>
    %106 = arith.addf %101, %105 : vector<80x128xf32>
    %c11_85 = arith.constant 11 : index
    %c0_86 = arith.constant 0 : index
    %107 = vector.load %arg7[%c11_85, %c0_86] : memref<104x128xf32, #tpu.memory_space<vmem>>, vector<80x128xf32>
    %c4_87 = arith.constant 4 : index
    %c0_88 = arith.constant 0 : index
    %c0_89 = arith.constant 0 : index
    %108 = vector.load %arg4[%c4_87, %c0_88, %c0_89] : memref<9x128x128xf32, #tpu.memory_space<vmem>>, vector<1x128x128xf32>
    %109 = vector.shape_cast %108 : vector<1x128x128xf32> to vector<128x128xf32>
    %cst_90 = arith.constant dense<0.000000e+00> : vector<80x128xf32>
    %110 = tpu.matmul %107, %109, %cst_90 {dimension_numbers = #tpu.dot_dimension_numbers<[1], [0], [0], [1], [0, 0, 1, 1], [], []>} : vector<80x128xf32>, vector<128x128xf32>, vector<80x128xf32> -> vector<80x128xf32>
    %111 = arith.addf %106, %110 : vector<80x128xf32>
    %c12_91 = arith.constant 12 : index
    %c0_92 = arith.constant 0 : index
    %112 = vector.load %arg7[%c12_91, %c0_92] : memref<104x128xf32, #tpu.memory_space<vmem>>, vector<80x128xf32>
    %c5_93 = arith.constant 5 : index
    %c0_94 = arith.constant 0 : index
    %c0_95 = arith.constant 0 : index
    %113 = vector.load %arg4[%c5_93, %c0_94, %c0_95] : memref<9x128x128xf32, #tpu.memory_space<vmem>>, vector<1x128x128xf32>
    %114 = vector.shape_cast %113 : vector<1x128x128xf32> to vector<128x128xf32>
    %cst_96 = arith.constant dense<0.000000e+00> : vector<80x128xf32>
    %115 = tpu.matmul %112, %114, %cst_96 {dimension_numbers = #tpu.dot_dimension_numbers<[1], [0], [0], [1], [0, 0, 1, 1], [], []>} : vector<80x128xf32>, vector<128x128xf32>, vector<80x128xf32> -> vector<80x128xf32>
    %116 = arith.addf %111, %115 : vector<80x128xf32>
    %c20_97 = arith.constant 20 : index
    %c0_98 = arith.constant 0 : index
    %117 = vector.load %arg7[%c20_97, %c0_98] : memref<104x128xf32, #tpu.memory_space<vmem>>, vector<80x128xf32>
    %c6_99 = arith.constant 6 : index
    %c0_100 = arith.constant 0 : index
    %c0_101 = arith.constant 0 : index
    %118 = vector.load %arg4[%c6_99, %c0_100, %c0_101] : memref<9x128x128xf32, #tpu.memory_space<vmem>>, vector<1x128x128xf32>
    %119 = vector.shape_cast %118 : vector<1x128x128xf32> to vector<128x128xf32>
    %cst_102 = arith.constant dense<0.000000e+00> : vector<80x128xf32>
    %120 = tpu.matmul %117, %119, %cst_102 {dimension_numbers = #tpu.dot_dimension_numbers<[1], [0], [0], [1], [0, 0, 1, 1], [], []>} : vector<80x128xf32>, vector<128x128xf32>, vector<80x128xf32> -> vector<80x128xf32>
    %121 = arith.addf %116, %120 : vector<80x128xf32>
    %c21_103 = arith.constant 21 : index
    %c0_104 = arith.constant 0 : index
    %122 = vector.load %arg7[%c21_103, %c0_104] : memref<104x128xf32, #tpu.memory_space<vmem>>, vector<80x128xf32>
    %c7_105 = arith.constant 7 : index
    %c0_106 = arith.constant 0 : index
    %c0_107 = arith.constant 0 : index
    %123 = vector.load %arg4[%c7_105, %c0_106, %c0_107] : memref<9x128x128xf32, #tpu.memory_space<vmem>>, vector<1x128x128xf32>
    %124 = vector.shape_cast %123 : vector<1x128x128xf32> to vector<128x128xf32>
    %cst_108 = arith.constant dense<0.000000e+00> : vector<80x128xf32>
    %125 = tpu.matmul %122, %124, %cst_108 {dimension_numbers = #tpu.dot_dimension_numbers<[1], [0], [0], [1], [0, 0, 1, 1], [], []>} : vector<80x128xf32>, vector<128x128xf32>, vector<80x128xf32> -> vector<80x128xf32>
    %126 = arith.addf %121, %125 : vector<80x128xf32>
    %c22_109 = arith.constant 22 : index
    %c0_110 = arith.constant 0 : index
    %127 = vector.load %arg7[%c22_109, %c0_110] : memref<104x128xf32, #tpu.memory_space<vmem>>, vector<80x128xf32>
    %c8_111 = arith.constant 8 : index
    %c0_112 = arith.constant 0 : index
    %c0_113 = arith.constant 0 : index
    %128 = vector.load %arg4[%c8_111, %c0_112, %c0_113] : memref<9x128x128xf32, #tpu.memory_space<vmem>>, vector<1x128x128xf32>
    %129 = vector.shape_cast %128 : vector<1x128x128xf32> to vector<128x128xf32>
    %cst_114 = arith.constant dense<0.000000e+00> : vector<80x128xf32>
    %130 = tpu.matmul %127, %129, %cst_114 {dimension_numbers = #tpu.dot_dimension_numbers<[1], [0], [0], [1], [0, 0, 1, 1], [], []>} : vector<80x128xf32>, vector<128x128xf32>, vector<80x128xf32> -> vector<80x128xf32>
    %131 = arith.addf %126, %130 : vector<80x128xf32>
    %c0_115 = arith.constant 0 : index
    %c0_116 = arith.constant 0 : index
    %132 = vector.load %arg5[%c0_115, %c0_116] : memref<1x128xf32, #tpu.memory_space<vmem>>, vector<1x128xf32>
    %133 = vector.broadcast %132 : vector<1x128xf32> to vector<80x128xf32>
    %134 = arith.addf %131, %133 : vector<80x128xf32>
    %cst_117 = arith.constant 0.000000e+00 : f32
    %135 = vector.broadcast %cst_117 : f32 to vector<80x128xf32>
    %136 = arith.maximumf %134, %135 : vector<80x128xf32>
    %c0_118 = arith.constant 0 : index
    %c0_119 = arith.constant 0 : index
    %c0_120 = arith.constant 0 : index
    %137 = vector.load %arg6[%c0_118, %c0_119, %c0_120] : memref<1x80x128xf32, #tpu.memory_space<vmem>>, vector<1x80x128xf32>
    %138 = vector.shape_cast %137 : vector<1x80x128xf32> to vector<80x128xf32>
    %139 = vector.shape_cast %136 : vector<80x128xf32> to vector<1x80x128xf32>
    tpu.vector_store %arg6[%c0_118, %c0_119, %c0_120], %139 {strides = array<i32>} : memref<1x80x128xf32, #tpu.memory_space<vmem>>, vector<1x80x128xf32>,
    return
  }
  func.func @transform_0(%arg0: i32) -> (i32, i32, i32) {
    %c0_i32 = arith.constant 0 : i32
    %c0_i32_0 = arith.constant 0 : i32
    %c0_i32_1 = arith.constant 0 : i32
    return %arg0, %c0_i32, %c0_i32_0 : i32, i32, i32
  }
  func.func @transform_1(%arg0: i32) -> (i32, i32, i32) {
    %c0_i32 = arith.constant 0 : i32
    %c0_i32_0 = arith.constant 0 : i32
    %c0_i32_1 = arith.constant 0 : i32
    %c0_i32_2 = arith.constant 0 : i32
    return %c0_i32, %c0_i32_0, %c0_i32_1 : i32, i32, i32
  }
  func.func @transform_2(%arg0: i32) -> (i32, i32) {
    %c0_i32 = arith.constant 0 : i32
    %c0_i32_0 = arith.constant 0 : i32
    %c0_i32_1 = arith.constant 0 : i32
    return %c0_i32, %c0_i32_0 : i32, i32
  }
  func.func @transform_3(%arg0: i32) -> (i32, i32, i32) {
    %c0_i32 = arith.constant 0 : i32
    %c0_i32_0 = arith.constant 0 : i32
    %c0_i32_1 = arith.constant 0 : i32
    %c0_i32_2 = arith.constant 0 : i32
    return %c0_i32, %c0_i32_0, %c0_i32_1 : i32, i32, i32
  }
  func.func @transform_4(%arg0: i32) -> (i32, i32) {
    %c0_i32 = arith.constant 0 : i32
    %c0_i32_0 = arith.constant 0 : i32
    %c0_i32_1 = arith.constant 0 : i32
    return %c0_i32, %c0_i32_0 : i32, i32
  }
  func.func @transform_5(%arg0: i32) -> (i32, i32, i32) {
    %c0_i32 = arith.constant 0 : i32
    %c0_i32_0 = arith.constant 0 : i32
    %c0_i32_1 = arith.constant 0 : i32
    return %arg0, %c0_i32, %c0_i32_0 : i32, i32, i32
  }
}

</mosaic_0001>

<llo_original>
// kernel: tpu_custom_call.1
$region0: #{tpu_custom_call.1}
  #allocation0 [shape = 'u32[]', space=smem, size = 0x4, offset = 0x4, fixed_abs, tag = 'smem constant byte address 0x4 - core index']
  #allocation1 [shape = 'u32[72,128]{1,0:T(1,128)}', space=vmem, size = 0x9000, scoped, tag = 'internal scratch']
  #allocation2 [shape = 'f32[104,128]{1,0:T(8,128)}', space=vmem, size = 0xd000, scoped, tag = 'scratch operand']
  %s0 = inlined_call_operand.hbm [shape: f32[2,104,128], index: 0, kind: input, shape index: {}]
  %s1 = inlined_call_operand.hbm [shape: f32[9,128,128], index: 1, kind: input, shape index: {}]
  %s2 = inlined_call_operand.vmem [shape: f32[1,128], index: 2, kind: input, shape index: {}]
  %s3 = inlined_call_operand.hbm [shape: f32[9,128,128], index: 3, kind: input, shape index: {}]
  %s4 = inlined_call_operand.vmem [shape: f32[1,128], index: 4, kind: input, shape index: {}]
  %s5 = inlined_call_operand.hbm [shape: f32[2,80,128], index: 5, kind: output, shape index: {}]
  %s6 = sld [smem:[#allocation0]]
  $region65: #{tpu_custom_call.1} parent=0
    _
  %s8 = ssub.s32 1, %s6
  %s9 = scalar_select 0, %s8, %s6
  $region1: #{tpu_custom_call.1} parent=0
    #allocation3 [shape = 'u8[106496]{0}', space=vmem, size = 0x1a000, scoped, tag = 'input window, operand 0']
    #allocation4 [shape = 's32[2]{0}', space=sflag, size = 0x8, scoped, tag = 'scoped memory for tpu_custom_call.1']
    #allocation5 [shape = 's32[2]{0}', space=sflag, size = 0x8, scoped, tag = 'scoped memory for tpu_custom_call.1']
    #allocation6 [shape = 'u8[589824]{0}', space=vmem, size = 0x90000, scoped, tag = 'input window, operand 1, single buffered']
    #allocation7 [shape = 's32[1]{0}', space=sflag, size = 0x4, scoped, tag = 'scoped memory for tpu_custom_call.1']
    #allocation8 [shape = 'u8[589824]{0}', space=vmem, size = 0x90000, scoped, tag = 'input window, operand 3, single buffered']
    #allocation9 [shape = 'u8[81920]{0}', space=vmem, size = 0x14000, scoped, tag = 'output window, operand 0']
    %10 = vsyncpa [#allocation4], 0
    %s11 = scalar_lea.sflag [#allocation4], 1
    %12 = vsyncpa %s11, 0
    %13 = vsyncpa [#allocation7], 0
    %14 = vsyncpa [#allocation5], 0
    %s15 = scalar_lea.sflag [#allocation5], 1
    %16 = vsyncpa %s15, 0
    loop: start=0, step=1, limit=4
    $region2: #{tpu_custom_call.1} parent=1 // loop_pre_header
      _
    $region3: #{tpu_custom_call.1} parent=1 // loop_header
      %s18 = sphi 0, %s22
      %p19 = scmp.ge.s32.totalorder %s18, 4
      %s28 = sphi 0, %s30
      %s31 = sphi 0, %s28
      %s32 = sphi 0, %s31
      %s48 = sphi 0, %s32
      %s52 = sphi 0, %s52
      %s54 = sphi 0, %s52
      %s55 = sphi 0, %s54
      %s69 = sphi 0, %s55
      %s73 = sphi 0, %s73
      %s75 = sphi 0, %s73
      %s76 = sphi 0, %s75
      %s90 = sphi 0, %s76
      %s94 = sphi 0, %s94
      %s96 = sphi 0, %s94
      %s97 = sphi 0, %s96
      %s111 = sphi 0, %s97
      %s115 = sphi 0, %s115
      %s117 = sphi 0, %s115
      %s118 = sphi 0, %s117
      %s132 = sphi 0, %s118
      %s138 = sphi 0, %s140
      %s141 = sphi 0, %s138
      %s142 = sphi 0, %s141
      %s158 = sphi 0, %s142
    $region4: #{tpu_custom_call.1} parent=1 // loop_header_branch
      %21 = sbr.rel (%p19) target = $region8
    $region5: #{tpu_custom_call.1} parent=1 // loop_body
      %s23 = ssub.s32 %s18, 1
      %s24 = ssub.s32 %s18, 2
      %s25 = sadd.s32 %s18, 1
      %s26 = ssub.s32 %s18, %s25
      %p27 = scmp.eq.s32.totalorder %s26, 0
      %s29 = sadd.s32 %s28, 1
      %s30 = scalar_select %p27, %s28, %s29
      %p33 = pneg %p27
      %p34 = scmp.eq.s32.totalorder %s18, 1
      %p35 = por %p33, %p34
      %p36 = scmp.ne.s32.totalorder %s28, %s31
      %p37 = scmp.eq.s32.totalorder %s18, 0
      %p38 = por %p36, %p37
      %p39 = scmp.ne.s32.totalorder %s28, %s31
      %p40 = scmp.eq.s32.totalorder %s23, 1
      %p41 = por %p39, %p40
      %p42 = scmp.ne.s32.totalorder %s31, %s32
      %p43 = scmp.eq.s32.totalorder %s23, 0
      %p44 = por %p42, %p43
      %p45 = scmp.ne.s32.totalorder %s31, %s32
      %p46 = scmp.eq.s32.totalorder %s24, 1
      %p47 = por %p45, %p46
      %p49 = scmp.ne.s32.totalorder %s32, %s48
      %p50 = scmp.eq.s32.totalorder %s24, 0
      %p51 = por %p49, %p50
      %s53 = sadd.s32 %s52, 1
      %p56 = scmp.eq.s32.totalorder %s18, 1
      %p57 = scmp.ne.s32.totalorder %s52, %s54
      %p58 = scmp.eq.s32.totalorder %s18, 0
      %p59 = por %p57, %p58
      %p60 = scmp.ne.s32.totalorder %s52, %s54
      %p61 = scmp.eq.s32.totalorder %s23, 1
      %p62 = por %p60, %p61
      %p63 = scmp.ne.s32.totalorder %s54, %s55
      %p64 = scmp.eq.s32.totalorder %s23, 0
      %p65 = por %p63, %p64
      %p66 = scmp.ne.s32.totalorder %s54, %s55
      %p67 = scmp.eq.s32.totalorder %s24, 1
      %p68 = por %p66, %p67
      %p70 = scmp.ne.s32.totalorder %s55, %s69
      %p71 = scmp.eq.s32.totalorder %s24, 0
      %p72 = por %p70, %p71
      %s74 = sadd.s32 %s73, 1
      %p77 = scmp.eq.s32.totalorder %s18, 1
      %p78 = scmp.ne.s32.totalorder %s73, %s75
      %p79 = scmp.eq.s32.totalorder %s18, 0
      %p80 = por %p78, %p79
      %p81 = scmp.ne.s32.totalorder %s73, %s75
      %p82 = scmp.eq.s32.totalorder %s23, 1
      %p83 = por %p81, %p82
      %p84 = scmp.ne.s32.totalorder %s75, %s76
      %p85 = scmp.eq.s32.totalorder %s23, 0
      %p86 = por %p84, %p85
      %p87 = scmp.ne.s32.totalorder %s75, %s76
      %p88 = scmp.eq.s32.totalorder %s24, 1
      %p89 = por %p87, %p88
      %p91 = scmp.ne.s32.totalorder %s76, %s90
      %p92 = scmp.eq.s32.totalorder %s24, 0
      %p93 = por %p91, %p92
      %s95 = sadd.s32 %s94, 1
      %p98 = scmp.eq.s32.totalorder %s18, 1
      %p99 = scmp.ne.s32.totalorder %s94, %s96
      %p100 = scmp.eq.s32.totalorder %s18, 0
      %p101 = por %p99, %p100
      %p102 = scmp.ne.s32.totalorder %s94, %s96
      %p103 = scmp.eq.s32.totalorder %s23, 1
      %p104 = por %p102, %p103
      %p105 = scmp.ne.s32.totalorder %s96, %s97
      %p106 = scmp.eq.s32.totalorder %s23, 0
      %p107 = por %p105, %p106
      %p108 = scmp.ne.s32.totalorder %s96, %s97
      %p109 = scmp.eq.s32.totalorder %s24, 1
      %p110 = por %p108, %p109
      %p112 = scmp.ne.s32.totalorder %s97, %s111
      %p113 = scmp.eq.s32.totalorder %s24, 0
      %p114 = por %p112, %p113
      %s116 = sadd.s32 %s115, 1
      %p119 = scmp.eq.s32.totalorder %s18, 1
      %p120 = scmp.ne.s32.totalorder %s115, %s117
      %p121 = scmp.eq.s32.totalorder %s18, 0
      %p122 = por %p120, %p121
      %p123 = scmp.ne.s32.totalorder %s115, %s117
      %p124 = scmp.eq.s32.totalorder %s23, 1
      %p125 = por %p123, %p124
      %p126 = scmp.ne.s32.totalorder %s117, %s118
      %p127 = scmp.eq.s32.totalorder %s23, 0
      %p128 = por %p126, %p127
      %p129 = scmp.ne.s32.totalorder %s117, %s118
      %p130 = scmp.eq.s32.totalorder %s24, 1
      %p131 = por %p129, %p130
      %p133 = scmp.ne.s32.totalorder %s118, %s132
      %p134 = scmp.eq.s32.totalorder %s24, 0
      %p135 = por %p133, %p134
      %s136 = ssub.s32 %s18, %s25
      %p137 = scmp.eq.s32.totalorder %s136, 0
      %s139 = sadd.s32 %s138, 1
      %s140 = scalar_select %p137, %s138, %s139
      %p143 = pneg %p137
      %p144 = scmp.eq.s32.totalorder %s18, 1
      %p145 = por %p143, %p144
      %p146 = scmp.ne.s32.totalorder %s138, %s141
      %p147 = scmp.eq.s32.totalorder %s18, 0
      %p148 = por %p146, %p147
      %p149 = scmp.ne.s32.totalorder %s138, %s141
      %p150 = scmp.eq.s32.totalorder %s23, 1
      %p151 = por %p149, %p150
      %p152 = scmp.ne.s32.totalorder %s141, %s142
      %p153 = scmp.eq.s32.totalorder %s23, 0
      %p154 = por %p152, %p153
      %p155 = scmp.ne.s32.totalorder %s141, %s142
      %p156 = scmp.eq.s32.totalorder %s24, 1
      %p157 = por %p155, %p156
      %p159 = scmp.ne.s32.totalorder %s142, %s158
      %p160 = scmp.eq.s32.totalorder %s24, 0
      %p161 = por %p159, %p160
      %p162 = scmp.le.s32.totalorder 1, %s18
      %p163 = scmp.lt.s32.totalorder %s18, 3
      %p164 = pnand %p162, %p163
      %p165 = pneg %p164
      // Predicated region
      $region9: #{tpu_custom_call.1} parent=5 // pred_check
        _
      $region10: #{tpu_custom_call.1} parent=5 // pred_check_branch
        %167 = sbr.rel (%p164) target = $region12
      $region11: #{tpu_custom_call.1} parent=5 // pred_region
        %s168 = ssub.s32 %s18, 1
        // Predicated region
        $region13: #{tpu_custom_call.1} parent=11 // pred_check
          %p169 = pneg %p65
        $region14: #{tpu_custom_call.1} parent=11 // pred_check_branch
          %171 = sbr.rel (%p169) target = $region16
        $region15: #{tpu_custom_call.1} parent=11 // pred_region
          %173 = vsyncadd [#allocation7], 0
          %s174 = sshll.u32 %s1, 4
          %s175 = int_to_ptr.hbm [resolvable:$true] %s174
          %s176 = sshll.u32 [#allocation6], 4
          %s177 = int_to_ptr.vmem [resolvable:$true] %s176
          %182 = dma.hbm_to_vmem [thread:$0]  %s175, 18432, %s177, [#allocation7], 128, 128, 8
        $region16: #{tpu_custom_call.1} parent=11 // pred_fallthru
          _
        // Predicated region
        $region17: #{tpu_custom_call.1} parent=11 // pred_check
          %p183 = pneg %p86
        $region18: #{tpu_custom_call.1} parent=11 // pred_check_branch
          %185 = sbr.rel (%p183) target = $region20
        $region19: #{tpu_custom_call.1} parent=11 // pred_region
          _
        $region20: #{tpu_custom_call.1} parent=11 // pred_fallthru
          _
        // Predicated region
        $region21: #{tpu_custom_call.1} parent=11 // pred_check
          %p186 = pneg %p107
        $region22: #{tpu_custom_call.1} parent=11 // pred_check_branch
          %188 = sbr.rel (%p186) target = $region24
        $region23: #{tpu_custom_call.1} parent=11 // pred_region
          %190 = vsyncadd [#allocation7], 0
          %s191 = sshll.u32 %s3, 4
          %s192 = int_to_ptr.hbm [resolvable:$true] %s191
          %s193 = sshll.u32 [#allocation8], 4
          %s194 = int_to_ptr.vmem [resolvable:$true] %s193
          %199 = dma.hbm_to_vmem [thread:$0]  %s192, 18432, %s194, [#allocation7], 128, 128, 8
        $region24: #{tpu_custom_call.1} parent=11 // pred_fallthru
          _
        // Predicated region
        $region25: #{tpu_custom_call.1} parent=11 // pred_check
          %p200 = pneg %p128
        $region26: #{tpu_custom_call.1} parent=11 // pred_check_branch
          %202 = sbr.rel (%p200) target = $region28
        $region27: #{tpu_custom_call.1} parent=11 // pred_region
          _
        $region28: #{tpu_custom_call.1} parent=11 // pred_fallthru
          _
      $region12: #{tpu_custom_call.1} parent=5 // pred_fallthru
        _
      %p203 = scmp.lt.s32.totalorder %s18, 2
      // Predicated region
      $region29: #{tpu_custom_call.1} parent=5 // pred_check
        %p204 = pneg %p203
      $region30: #{tpu_custom_call.1} parent=5 // pred_check_branch
        %206 = sbr.rel (%p204) target = $region32
      $region31: #{tpu_custom_call.1} parent=5 // pred_region
        // Predicated region
        $region33: #{tpu_custom_call.1} parent=31 // pred_check
          %p207 = pneg %p38
        $region34: #{tpu_custom_call.1} parent=31 // pred_check_branch
          %209 = sbr.rel (%p207) target = $region36
        $region35: #{tpu_custom_call.1} parent=31 // pred_region
          %s210 = sand.u32 %s28, 1
          %s211 = scalar_lea.sflag [#allocation4], %s210
          %s212 = sand.u32 %s28, 1
          %s213 = smul.addr %s212, 104
          %s214 = scalar_lea.vmem [#allocation3], %s213
          %216 = vsyncadd %s211, 0
          %s217 = smul.addr %s18, 13
          %s218 = smul.addr %s217, 8
          %s219 = scalar_lea.hbm %s0, %s218
          %s220 = sshll.u32 %s219, 4
          %s221 = int_to_ptr.hbm [resolvable:$true] %s220
          %s222 = sshll.u32 %s214, 4
          %s223 = int_to_ptr.vmem [resolvable:$true] %s222
          %228 = dma.hbm_to_vmem [thread:$0]  %s221, 1664, %s223, %s211, 128, 128, 8
        $region36: #{tpu_custom_call.1} parent=31 // pred_fallthru
          _
      $region32: #{tpu_custom_call.1} parent=5 // pred_fallthru
        _
      %p229 = scmp.le.s32.totalorder 1, %s18
      %p230 = scmp.lt.s32.totalorder %s18, 3
      %p231 = pnand %p229, %p230
      %p232 = pneg %p231
      // Predicated region
      $region37: #{tpu_custom_call.1} parent=5 // pred_check
        _
      $region38: #{tpu_custom_call.1} parent=5 // pred_check_branch
        %234 = sbr.rel (%p231) target = $region40
      $region39: #{tpu_custom_call.1} parent=5 // pred_region
        %s235 = ssub.s32 %s18, 1
        %s236 = sand.u32 %s31, 1
        %s237 = scalar_lea.sflag [#allocation4], %s236
        %s238 = sand.u32 %s31, 1
        %s239 = smul.addr %s238, 104
        %s240 = scalar_lea.vmem [#allocation3], %s239
        // Predicated region
        $region41: #{tpu_custom_call.1} parent=39 // pred_check
          %p241 = pneg %p44
        $region42: #{tpu_custom_call.1} parent=39 // pred_check_branch
          %243 = sbr.rel (%p241) target = $region44
        $region43: #{tpu_custom_call.1} parent=39 // pred_region
          %245 = dma.done %s237, 1664
        $region44: #{tpu_custom_call.1} parent=39 // pred_fallthru
          _
        // Predicated region
        $region45: #{tpu_custom_call.1} parent=39 // pred_check
          %p246 = pneg %p65
        $region46: #{tpu_custom_call.1} parent=39 // pred_check_branch
          %248 = sbr.rel (%p246) target = $region48
        $region47: #{tpu_custom_call.1} parent=39 // pred_region
          %250 = dma.done [#allocation7], 18432
        $region48: #{tpu_custom_call.1} parent=39 // pred_fallthru
          _
        // Predicated region
        $region49: #{tpu_custom_call.1} parent=39 // pred_check
          %p251 = pneg %p107
        $region50: #{tpu_custom_call.1} parent=39 // pred_check_branch
          %253 = sbr.rel (%p251) target = $region52
        $region51: #{tpu_custom_call.1} parent=39 // pred_region
          %255 = dma.done [#allocation7], 18432
        $region52: #{tpu_custom_call.1} parent=39 // pred_fallthru
          _
        %s256 = sand.u32 %s31, 1
        %s257 = scalar_lea.sflag [#allocation4], %s256
        %s258 = sand.u32 %s31, 1
        %s259 = smul.addr %s258, 104
        %s260 = scalar_lea.vmem [#allocation3], %s259
        %p261 = pneg %p44
        %p262 = pneg %p41
        %p263 = pneg %p65
        %p264 = pneg %p62
        %p265 = pneg %p86
        %p266 = pneg %p83
        %p267 = pneg %p107
        %p268 = pneg %p104
        %p269 = pneg %p128
        %p270 = pneg %p125
        %p271 = pneg %p154
        %p272 = pneg %p151
        %s273 = sand.u32 %s141, 1
        %s274 = scalar_lea.sflag [#allocation5], %s273
        %s275 = sand.u32 %s141, 1
        %s276 = smul.addr %s275, 80
        %s277 = scalar_lea.vmem [#allocation9], %s276
        %v278 = vlaneseq
        %v279 = vshrl.u32 %v278, 7
        %v280 = vadd.s32 %v279, 8
        %v281 = vadd.s32 %v279, 16
        %v282 = vadd.s32 %v279, 24
        %v283 = vadd.s32 %v279, 32
        %v284 = vadd.s32 %v279, 40
        %v285 = vadd.s32 %v279, 48
        %v286 = vadd.s32 %v279, 56
        %v287 = vadd.s32 %v279, 64
        %v288 = vadd.s32 %v279, 72
        %vm289 = vcmp.lt.s32.totalorder %v279, 0
        %v290 = vsub.s32 0, %v279
        %v291 = vsel %vm289, %v290, %v279
        %v292 = vand.u32 %v291, 65535
        %v293 = vshrl.u32 %v291, 16
        %v295 = vmul.u32 %v292, 52429
        %v296 = vmul.u32 %v292, 52428
        %v297 = vmul.u32 %v293, 52429
        %v298 = vmul.u32 %v293, 52428
        %v299 = vshll.u32 %v296, 16
        %v300 = vshrl.u32 %v296, 16
        %v301 = vshll.u32 %v297, 16
        %v302 = vshrl.u32 %v297, 16
        %vm303 = vc.u32 %v295, %v299
        %v304 = vsel %vm303, 1, 0
        %v305 = vadd.s32 %v295, %v299
        %v306 = vadd.s32 %v298, %v304
        %vm307 = vc.u32 %v305, %v301
        %v308 = vsel %vm307, 1, 0
        %v309 = vadd.s32 %v305, %v301
        %v310 = vadd.s32 %v306, %v308
        %v311 = vadd.s32 %v310, %v300
        %v312 = vadd.s32 %v311, %v302
        %v313 = vshrl.u32 %v312, 3
        %v314 = vmul.u32 %v313, 10
        %v315 = vsub.s32 %v291, %v314
        %v316 = vsub.s32 0, %v315
        %v317 = vsel %vm289, %v316, %v315
        %vm318 = vcmp.lt.s32.totalorder %v280, 0
        %v319 = vsub.s32 0, %v280
        %v320 = vsel %vm318, %v319, %v280
        %v321 = vand.u32 %v320, 65535
        %v322 = vshrl.u32 %v320, 16
        %v324 = vmul.u32 %v321, 52429
        %v325 = vmul.u32 %v321, 52428
        %v326 = vmul.u32 %v322, 52429
        %v327 = vmul.u32 %v322, 52428
        %v328 = vshll.u32 %v325, 16
        %v329 = vshrl.u32 %v325, 16
        %v330 = vshll.u32 %v326, 16
        %v331 = vshrl.u32 %v326, 16
        %vm332 = vc.u32 %v324, %v328
        %v333 = vsel %vm332, 1, 0
        %v334 = vadd.s32 %v324, %v328
        %v335 = vadd.s32 %v327, %v333
        %vm336 = vc.u32 %v334, %v330
        %v337 = vsel %vm336, 1, 0
        %v338 = vadd.s32 %v334, %v330
        %v339 = vadd.s32 %v335, %v337
        %v340 = vadd.s32 %v339, %v329
        %v341 = vadd.s32 %v340, %v331
        %v342 = vshrl.u32 %v341, 3
        %v343 = vmul.u32 %v342, 10
        %v344 = vsub.s32 %v320, %v343
        %v345 = vsub.s32 0, %v344
        %v346 = vsel %vm318, %v345, %v344
        %vm347 = vcmp.lt.s32.totalorder %v281, 0
        %v348 = vsub.s32 0, %v281
        %v349 = vsel %vm347, %v348, %v281
        %v350 = vand.u32 %v349, 65535
        %v351 = vshrl.u32 %v349, 16
        %v353 = vmul.u32 %v350, 52429
        %v354 = vmul.u32 %v350, 52428
        %v355 = vmul.u32 %v351, 52429
        %v356 = vmul.u32 %v351, 52428
        %v357 = vshll.u32 %v354, 16
        %v358 = vshrl.u32 %v354, 16
        %v359 = vshll.u32 %v355, 16
        %v360 = vshrl.u32 %v355, 16
        %vm361 = vc.u32 %v353, %v357
        %v362 = vsel %vm361, 1, 0
        %v363 = vadd.s32 %v353, %v357
        %v364 = vadd.s32 %v356, %v362
        %vm365 = vc.u32 %v363, %v359
        %v366 = vsel %vm365, 1, 0
        %v367 = vadd.s32 %v363, %v359
        %v368 = vadd.s32 %v364, %v366
        %v369 = vadd.s32 %v368, %v358
        %v370 = vadd.s32 %v369, %v360
        %v371 = vshrl.u32 %v370, 3
        %v372 = vmul.u32 %v371, 10
        %v373 = vsub.s32 %v349, %v372
        %v374 = vsub.s32 0, %v373
        %v375 = vsel %vm347, %v374, %v373
        %vm376 = vcmp.lt.s32.totalorder %v282, 0
        %v377 = vsub.s32 0, %v282
        %v378 = vsel %vm376, %v377, %v282
        %v379 = vand.u32 %v378, 65535
        %v380 = vshrl.u32 %v378, 16
        %v382 = vmul.u32 %v379, 52429
        %v383 = vmul.u32 %v379, 52428
        %v384 = vmul.u32 %v380, 52429
        %v385 = vmul.u32 %v380, 52428
        %v386 = vshll.u32 %v383, 16
        %v387 = vshrl.u32 %v383, 16
        %v388 = vshll.u32 %v384, 16
        %v389 = vshrl.u32 %v384, 16
        %vm390 = vc.u32 %v382, %v386
        %v391 = vsel %vm390, 1, 0
        %v392 = vadd.s32 %v382, %v386
        %v393 = vadd.s32 %v385, %v391
        %vm394 = vc.u32 %v392, %v388
        %v395 = vsel %vm394, 1, 0
        %v396 = vadd.s32 %v392, %v388
        %v397 = vadd.s32 %v393, %v395
        %v398 = vadd.s32 %v397, %v387
        %v399 = vadd.s32 %v398, %v389
        %v400 = vshrl.u32 %v399, 3
        %v401 = vmul.u32 %v400, 10
        %v402 = vsub.s32 %v378, %v401
        %v403 = vsub.s32 0, %v402
        %v404 = vsel %vm376, %v403, %v402
        %vm405 = vcmp.lt.s32.totalorder %v283, 0
        %v406 = vsub.s32 0, %v283
        %v407 = vsel %vm405, %v406, %v283
        %v408 = vand.u32 %v407, 65535
        %v409 = vshrl.u32 %v407, 16
        %v411 = vmul.u32 %v408, 52429
        %v412 = vmul.u32 %v408, 52428
        %v413 = vmul.u32 %v409, 52429
        %v414 = vmul.u32 %v409, 52428
        %v415 = vshll.u32 %v412, 16
        %v416 = vshrl.u32 %v412, 16
        %v417 = vshll.u32 %v413, 16
        %v418 = vshrl.u32 %v413, 16
        %vm419 = vc.u32 %v411, %v415
        %v420 = vsel %vm419, 1, 0
        %v421 = vadd.s32 %v411, %v415
        %v422 = vadd.s32 %v414, %v420
        %vm423 = vc.u32 %v421, %v417
        %v424 = vsel %vm423, 1, 0
        %v425 = vadd.s32 %v421, %v417
        %v426 = vadd.s32 %v422, %v424
        %v427 = vadd.s32 %v426, %v416
        %v428 = vadd.s32 %v427, %v418
        %v429 = vshrl.u32 %v428, 3
        %v430 = vmul.u32 %v429, 10
        %v431 = vsub.s32 %v407, %v430
        %v432 = vsub.s32 0, %v431
        %v433 = vsel %vm405, %v432, %v431
        %vm434 = vcmp.lt.s32.totalorder %v284, 0
        %v435 = vsub.s32 0, %v284
        %v436 = vsel %vm434, %v435, %v284
        %v437 = vand.u32 %v436, 65535
        %v438 = vshrl.u32 %v436, 16
        %v440 = vmul.u32 %v437, 52429
        %v441 = vmul.u32 %v437, 52428
        %v442 = vmul.u32 %v438, 52429
        %v443 = vmul.u32 %v438, 52428
        %v444 = vshll.u32 %v441, 16
        %v445 = vshrl.u32 %v441, 16
        %v446 = vshll.u32 %v442, 16
        %v447 = vshrl.u32 %v442, 16
        %vm448 = vc.u32 %v440, %v444
        %v449 = vsel %vm448, 1, 0
        %v450 = vadd.s32 %v440, %v444
        %v451 = vadd.s32 %v443, %v449
        %vm452 = vc.u32 %v450, %v446
        %v453 = vsel %vm452, 1, 0
        %v454 = vadd.s32 %v450, %v446
        %v455 = vadd.s32 %v451, %v453
        %v456 = vadd.s32 %v455, %v445
        %v457 = vadd.s32 %v456, %v447
        %v458 = vshrl.u32 %v457, 3
        %v459 = vmul.u32 %v458, 10
        %v460 = vsub.s32 %v436, %v459
        %v461 = vsub.s32 0, %v460
        %v462 = vsel %vm434, %v461, %v460
        %vm463 = vcmp.lt.s32.totalorder %v285, 0
        %v464 = vsub.s32 0, %v285
        %v465 = vsel %vm463, %v464, %v285
        %v466 = vand.u32 %v465, 65535
        %v467 = vshrl.u32 %v465, 16
        %v469 = vmul.u32 %v466, 52429
        %v470 = vmul.u32 %v466, 52428
        %v471 = vmul.u32 %v467, 52429
        %v472 = vmul.u32 %v467, 52428
        %v473 = vshll.u32 %v470, 16
        %v474 = vshrl.u32 %v470, 16
        %v475 = vshll.u32 %v471, 16
        %v476 = vshrl.u32 %v471, 16
        %vm477 = vc.u32 %v469, %v473
        %v478 = vsel %vm477, 1, 0
        %v479 = vadd.s32 %v469, %v473
        %v480 = vadd.s32 %v472, %v478
        %vm481 = vc.u32 %v479, %v475
        %v482 = vsel %vm481, 1, 0
        %v483 = vadd.s32 %v479, %v475
        %v484 = vadd.s32 %v480, %v482
        %v485 = vadd.s32 %v484, %v474
        %v486 = vadd.s32 %v485, %v476
        %v487 = vshrl.u32 %v486, 3
        %v488 = vmul.u32 %v487, 10
        %v489 = vsub.s32 %v465, %v488
        %v490 = vsub.s32 0, %v489
        %v491 = vsel %vm463, %v490, %v489
        %vm492 = vcmp.lt.s32.totalorder %v286, 0
        %v493 = vsub.s32 0, %v286
        %v494 = vsel %vm492, %v493, %v286
        %v495 = vand.u32 %v494, 65535
        %v496 = vshrl.u32 %v494, 16
        %v498 = vmul.u32 %v495, 52429
        %v499 = vmul.u32 %v495, 52428
        %v500 = vmul.u32 %v496, 52429
        %v501 = vmul.u32 %v496, 52428
        %v502 = vshll.u32 %v499, 16
        %v503 = vshrl.u32 %v499, 16
        %v504 = vshll.u32 %v500, 16
        %v505 = vshrl.u32 %v500, 16
        %vm506 = vc.u32 %v498, %v502
        %v507 = vsel %vm506, 1, 0
        %v508 = vadd.s32 %v498, %v502
        %v509 = vadd.s32 %v501, %v507
        %vm510 = vc.u32 %v508, %v504
        %v511 = vsel %vm510, 1, 0
        %v512 = vadd.s32 %v508, %v504
        %v513 = vadd.s32 %v509, %v511
        %v514 = vadd.s32 %v513, %v503
        %v515 = vadd.s32 %v514, %v505
        %v516 = vshrl.u32 %v515, 3
        %v517 = vmul.u32 %v516, 10
        %v518 = vsub.s32 %v494, %v517
        %v519 = vsub.s32 0, %v518
        %v520 = vsel %vm492, %v519, %v518
        %vm521 = vcmp.lt.s32.totalorder %v287, 0
        %v522 = vsub.s32 0, %v287
        %v523 = vsel %vm521, %v522, %v287
        %v524 = vand.u32 %v523, 65535
        %v525 = vshrl.u32 %v523, 16
        %v527 = vmul.u32 %v524, 52429
        %v528 = vmul.u32 %v524, 52428
        %v529 = vmul.u32 %v525, 52429
        %v530 = vmul.u32 %v525, 52428
        %v531 = vshll.u32 %v528, 16
        %v532 = vshrl.u32 %v528, 16
        %v533 = vshll.u32 %v529, 16
        %v534 = vshrl.u32 %v529, 16
        %vm535 = vc.u32 %v527, %v531
        %v536 = vsel %vm535, 1, 0
        %v537 = vadd.s32 %v527, %v531
        %v538 = vadd.s32 %v530, %v536
        %vm539 = vc.u32 %v537, %v533
        %v540 = vsel %vm539, 1, 0
        %v541 = vadd.s32 %v537, %v533
        %v542 = vadd.s32 %v538, %v540
        %v543 = vadd.s32 %v542, %v532
        %v544 = vadd.s32 %v543, %v534
        %v545 = vshrl.u32 %v544, 3
        %v546 = vmul.u32 %v545, 10
        %v547 = vsub.s32 %v523, %v546
        %v548 = vsub.s32 0, %v547
        %v549 = vsel %vm521, %v548, %v547
        %vm550 = vcmp.lt.s32.totalorder %v288, 0
        %v551 = vsub.s32 0, %v288
        %v552 = vsel %vm550, %v551, %v288
        %v553 = vand.u32 %v552, 65535
        %v554 = vshrl.u32 %v552, 16
        %v556 = vmul.u32 %v553, 52429
        %v557 = vmul.u32 %v553, 52428
        %v558 = vmul.u32 %v554, 52429
        %v559 = vmul.u32 %v554, 52428
        %v560 = vshll.u32 %v557, 16
        %v561 = vshrl.u32 %v557, 16
        %v562 = vshll.u32 %v558, 16
        %v563 = vshrl.u32 %v558, 16
        %vm564 = vc.u32 %v556, %v560
        %v565 = vsel %vm564, 1, 0
        %v566 = vadd.s32 %v556, %v560
        %v567 = vadd.s32 %v559, %v565
        %vm568 = vc.u32 %v566, %v562
        %v569 = vsel %vm568, 1, 0
        %v570 = vadd.s32 %v566, %v562
        %v571 = vadd.s32 %v567, %v569
        %v572 = vadd.s32 %v571, %v561
        %v573 = vadd.s32 %v572, %v563
        %v574 = vshrl.u32 %v573, 3
        %v575 = vmul.u32 %v574, 10
        %v576 = vsub.s32 %v552, %v575
        %v577 = vsub.s32 0, %v576
        %v578 = vsel %vm550, %v577, %v576
        %vm579 = vcmp.ne.s32.totalorder %v317, 0
        %vm580 = vcmp.ne.s32.totalorder %v346, 0
        %vm581 = vcmp.ne.s32.totalorder %v375, 0
        %vm582 = vcmp.ne.s32.totalorder %v404, 0
        %vm583 = vcmp.ne.s32.totalorder %v433, 0
        %vm584 = vcmp.ne.s32.totalorder %v462, 0
        %vm585 = vcmp.ne.s32.totalorder %v491, 0
        %vm586 = vcmp.ne.s32.totalorder %v520, 0
        %vm587 = vcmp.ne.s32.totalorder %v549, 0
        %vm588 = vcmp.ne.s32.totalorder %v578, 0
        %vm589 = vcmp.lt.s32.totalorder %v317, 0
        %vm590 = vcmp.lt.s32.totalorder %v346, 0
        %vm591 = vcmp.lt.s32.totalorder %v375, 0
        %vm592 = vcmp.lt.s32.totalorder %v404, 0
        %vm593 = vcmp.lt.s32.totalorder %v433, 0
        %vm594 = vcmp.lt.s32.totalorder %v462, 0
        %vm595 = vcmp.lt.s32.totalorder %v491, 0
        %vm596 = vcmp.lt.s32.totalorder %v520, 0
        %vm597 = vcmp.lt.s32.totalorder %v549, 0
        %vm598 = vcmp.lt.s32.totalorder %v578, 0
        %vm599 = vmand %vm589, %vm579
        %vm600 = vmand %vm590, %vm580
        %vm601 = vmand %vm591, %vm581
        %vm602 = vmand %vm592, %vm582
        %vm603 = vmand %vm593, %vm583
        %vm604 = vmand %vm594, %vm584
        %vm605 = vmand %vm595, %vm585
        %vm606 = vmand %vm596, %vm586
        %vm607 = vmand %vm597, %vm587
        %vm608 = vmand %vm598, %vm588
        %v609 = vadd.s32 %v317, 10
        %v610 = vadd.s32 %v346, 10
        %v611 = vadd.s32 %v375, 10
        %v612 = vadd.s32 %v404, 10
        %v613 = vadd.s32 %v433, 10
        %v614 = vadd.s32 %v462, 10
        %v615 = vadd.s32 %v491, 10
        %v616 = vadd.s32 %v520, 10
        %v617 = vadd.s32 %v549, 10
        %v618 = vadd.s32 %v578, 10
        %v619 = vsel %vm599, %v609, %v317
        %v620 = vsel %vm600, %v610, %v346
        %v621 = vsel %vm601, %v611, %v375
        %v622 = vsel %vm602, %v612, %v404
        %v623 = vsel %vm603, %v613, %v433
        %v624 = vsel %vm604, %v614, %v462
        %v625 = vsel %vm605, %v615, %v491
        %v626 = vsel %vm606, %v616, %v520
        %v627 = vsel %vm607, %v617, %v549
        %v628 = vsel %vm608, %v618, %v578
        %vm629 = vcmp.lt.s32.totalorder %v619, 8
        %vm630 = vcmp.lt.s32.totalorder %v620, 8
        %vm631 = vcmp.lt.s32.totalorder %v621, 8
        %vm632 = vcmp.lt.s32.totalorder %v622, 8
        %vm633 = vcmp.lt.s32.totalorder %v623, 8
        %vm634 = vcmp.lt.s32.totalorder %v624, 8
        %vm635 = vcmp.lt.s32.totalorder %v625, 8
        %vm636 = vcmp.lt.s32.totalorder %v626, 8
        %vm637 = vcmp.lt.s32.totalorder %v627, 8
        %vm638 = vcmp.lt.s32.totalorder %v628, 8
        %v639 = vld [vmem:[%s240] sm:$0xff]
        %v640 = vld [vmem:[%s240 + $0x8] sm:$0xff]
        %v641 = vld [vmem:[%s240 + $0x10] sm:$0xff]
        %v642 = vld [vmem:[%s240 + $0x18] sm:$0xff]
        %v643 = vld [vmem:[%s240 + $0x20] sm:$0xff]
        %v644 = vld [vmem:[%s240 + $0x28] sm:$0xff]
        %v645 = vld [vmem:[%s240 + $0x30] sm:$0xff]
        %v646 = vld [vmem:[%s240 + $0x38] sm:$0xff]
        %v647 = vld [vmem:[%s240 + $0x40] sm:$0xff]
        %v648 = vld [vmem:[%s240 + $0x48] sm:$0xff]
        %v649 = vld [vmem:[#allocation6] sm:$0xff]
        %v650 = vld [vmem:[#allocation6 + $0x8] sm:$0xff]
        %v651 = vld [vmem:[#allocation6 + $0x10] sm:$0xff]
        %v652 = vld [vmem:[#allocation6 + $0x18] sm:$0xff]
        %v653 = vld [vmem:[#allocation6 + $0x20] sm:$0xff]
        %v654 = vld [vmem:[#allocation6 + $0x28] sm:$0xff]
        %v655 = vld [vmem:[#allocation6 + $0x30] sm:$0xff]
        %v656 = vld [vmem:[#allocation6 + $0x38] sm:$0xff]
        %v657 = vld [vmem:[#allocation6 + $0x40] sm:$0xff]
        %v658 = vld [vmem:[#allocation6 + $0x48] sm:$0xff]
        %v659 = vld [vmem:[#allocation6 + $0x50] sm:$0xff]
        %v660 = vld [vmem:[#allocation6 + $0x58] sm:$0xff]
        %v661 = vld [vmem:[#allocation6 + $0x60] sm:$0xff]
        %v662 = vld [vmem:[#allocation6 + $0x68] sm:$0xff]
        %v663 = vld [vmem:[#allocation6 + $0x70] sm:$0xff]
        %v664 = vld [vmem:[#allocation6 + $0x78] sm:$0xff]
        %v665 = vld [vmem:[%s240 + $0x1] sm:$0xff]
        %v666 = vld [vmem:[%s240 + $0x9] sm:$0xff]
        %v667 = vld [vmem:[%s240 + $0x11] sm:$0xff]
        %v668 = vld [vmem:[%s240 + $0x19] sm:$0xff]
        %v669 = vld [vmem:[%s240 + $0x21] sm:$0xff]
        %v670 = vld [vmem:[%s240 + $0x29] sm:$0xff]
        %v671 = vld [vmem:[%s240 + $0x31] sm:$0xff]
        %v672 = vld [vmem:[%s240 + $0x39] sm:$0xff]
        %v673 = vld [vmem:[%s240 + $0x41] sm:$0xff]
        %v674 = vld [vmem:[%s240 + $0x49] sm:$0xff]
        %s675 = scalar_lea.vmem [#allocation6], 128
        %v676 = vld [vmem:[%s675] sm:$0xff]
        %v677 = vld [vmem:[%s675 + $0x8] sm:$0xff]
        %v678 = vld [vmem:[%s675 + $0x10] sm:$0xff]
        %v679 = vld [vmem:[%s675 + $0x18] sm:$0xff]
        %v680 = vld [vmem:[%s675 + $0x20] sm:$0xff]
        %v681 = vld [vmem:[%s675 + $0x28] sm:$0xff]
        %v682 = vld [vmem:[%s675 + $0x30] sm:$0xff]
        %v683 = vld [vmem:[%s675 + $0x38] sm:$0xff]
        %v684 = vld [vmem:[%s675 + $0x40] sm:$0xff]
        %v685 = vld [vmem:[%s675 + $0x48] sm:$0xff]
        %v686 = vld [vmem:[%s675 + $0x50] sm:$0xff]
        %v687 = vld [vmem:[%s675 + $0x58] sm:$0xff]
        %v688 = vld [vmem:[%s675 + $0x60] sm:$0xff]
        %v689 = vld [vmem:[%s675 + $0x68] sm:$0xff]
        %v690 = vld [vmem:[%s675 + $0x70] sm:$0xff]
        %v691 = vld [vmem:[%s675 + $0x78] sm:$0xff]
        %692 = vmatpush.msra.mxu0 %v691
        %693 = vmatpush.msra.mxu0 %v690
        %694 = vmatpush.msra.mxu0 %v689
        %695 = vmatpush.msra.mxu0 %v688
        %696 = vmatpush.msra.mxu0 %v687
        %697 = vmatpush.msra.mxu0 %v686
        %698 = vmatpush.msra.mxu0 %v685
        %699 = vmatpush.msra.mxu0 %v684
        %700 = vmatpush.msra.mxu0 %v683
        %701 = vmatpush.msra.mxu0 %v682
        %702 = vmatpush.msra.mxu0 %v681
        %703 = vmatpush.msra.mxu0 %v680
        %704 = vmatpush.msra.mxu0 %v679
        %705 = vmatpush.msra.mxu0 %v678
        %706 = vmatpush.msra.mxu0 %v677
        %707 = vmatpush.msra.mxu0 %v676
        %708 = vmatmul.f32.gmra.mxu0 %v665
        %v709 = vpop.f32.mrf.mxu0
        %v710 = vadd.f32 0.0, %v709
        %711 = vmatmul.f32.gmra.mxu0 %v666
        %v712 = vpop.f32.mrf.mxu0
        %v713 = vadd.f32 0.0, %v712
        %714 = vmatmul.f32.gmra.mxu0 %v667
        %v715 = vpop.f32.mrf.mxu0
        %v716 = vadd.f32 0.0, %v715
        %717 = vmatmul.f32.gmra.mxu0 %v668
        %v718 = vpop.f32.mrf.mxu0
        %v719 = vadd.f32 0.0, %v718
        %720 = vmatmul.f32.gmra.mxu0 %v669
        %v721 = vpop.f32.mrf.mxu0
        %v722 = vadd.f32 0.0, %v721
        %723 = vmatmul.f32.gmra.mxu0 %v670
        %v724 = vpop.f32.mrf.mxu0
        %v725 = vadd.f32 0.0, %v724
        %726 = vmatmul.f32.gmra.mxu0 %v671
        %v727 = vpop.f32.mrf.mxu0
        %v728 = vadd.f32 0.0, %v727
        %729 = vmatmul.f32.gmra.mxu0 %v672
        %v730 = vpop.f32.mrf.mxu0
        %v731 = vadd.f32 0.0, %v730
        %732 = vmatmul.f32.gmra.mxu0 %v673
        %v733 = vpop.f32.mrf.mxu0
        %v734 = vadd.f32 0.0, %v733
        %735 = vmatmul.f32.gmra.mxu0 %v674
        %v736 = vpop.f32.mrf.mxu0
        %v737 = vadd.f32 0.0, %v736
        %738 = vdwg.mxu0
        %739 = vmatpush.msra.mxu0 %v664
        %740 = vmatpush.msra.mxu0 %v663
        %741 = vmatpush.msra.mxu0 %v662
        %742 = vmatpush.msra.mxu0 %v661
        %743 = vmatpush.msra.mxu0 %v660
        %744 = vmatpush.msra.mxu0 %v659
        %745 = vmatpush.msra.mxu0 %v658
        %746 = vmatpush.msra.mxu0 %v657
        %747 = vmatpush.msra.mxu0 %v656
        %748 = vmatpush.msra.mxu0 %v655
        %749 = vmatpush.msra.mxu0 %v654
        %750 = vmatpush.msra.mxu0 %v653
        %751 = vmatpush.msra.mxu0 %v652
        %752 = vmatpush.msra.mxu0 %v651
        %753 = vmatpush.msra.mxu0 %v650
        %754 = vmatpush.msra.mxu0 %v649
        %755 = vmatmul.f32.gmra.mxu0 %v639
        %v756 = vpop.f32.mrf.mxu0
        %v757 = vadd.f32 %v710, %v756
        %758 = vmatmul.f32.gmra.mxu0 %v640
        %v759 = vpop.f32.mrf.mxu0
        %v760 = vadd.f32 %v713, %v759
        %761 = vmatmul.f32.gmra.mxu0 %v641
        %v762 = vpop.f32.mrf.mxu0
        %v763 = vadd.f32 %v716, %v762
        %764 = vmatmul.f32.gmra.mxu0 %v642
        %v765 = vpop.f32.mrf.mxu0
        %v766 = vadd.f32 %v719, %v765
        %767 = vmatmul.f32.gmra.mxu0 %v643
        %v768 = vpop.f32.mrf.mxu0
        %v769 = vadd.f32 %v722, %v768
        %770 = vmatmul.f32.gmra.mxu0 %v644
        %v771 = vpop.f32.mrf.mxu0
        %v772 = vadd.f32 %v725, %v771
        %773 = vmatmul.f32.gmra.mxu0 %v645
        %v774 = vpop.f32.mrf.mxu0
        %v775 = vadd.f32 %v728, %v774
        %776 = vmatmul.f32.gmra.mxu0 %v646
        %v777 = vpop.f32.mrf.mxu0
        %v778 = vadd.f32 %v731, %v777
        %779 = vmatmul.f32.gmra.mxu0 %v647
        %v780 = vpop.f32.mrf.mxu0
        %v781 = vadd.f32 %v734, %v780
        %782 = vmatmul.f32.gmra.mxu0 %v648
        %v783 = vpop.f32.mrf.mxu0
        %v784 = vadd.f32 %v737, %v783
        %785 = vdwg.mxu0
        %v786 = vld [vmem:[%s240 + $0x2] sm:$0xff]
        %v787 = vld [vmem:[%s240 + $0xa] sm:$0xff]
        %v788 = vld [vmem:[%s240 + $0x12] sm:$0xff]
        %v789 = vld [vmem:[%s240 + $0x1a] sm:$0xff]
        %v790 = vld [vmem:[%s240 + $0x22] sm:$0xff]
        %v791 = vld [vmem:[%s240 + $0x2a] sm:$0xff]
        %v792 = vld [vmem:[%s240 + $0x32] sm:$0xff]
        %v793 = vld [vmem:[%s240 + $0x3a] sm:$0xff]
        %v794 = vld [vmem:[%s240 + $0x42] sm:$0xff]
        %v795 = vld [vmem:[%s240 + $0x4a] sm:$0xff]
        %s796 = scalar_lea.vmem [#allocation6], 256
        %v797 = vld [vmem:[%s796] sm:$0xff]
        %v798 = vld [vmem:[%s796 + $0x8] sm:$0xff]
        %v799 = vld [vmem:[%s796 + $0x10] sm:$0xff]
        %v800 = vld [vmem:[%s796 + $0x18] sm:$0xff]
        %v801 = vld [vmem:[%s796 + $0x20] sm:$0xff]
        %v802 = vld [vmem:[%s796 + $0x28] sm:$0xff]
        %v803 = vld [vmem:[%s796 + $0x30] sm:$0xff]
        %v804 = vld [vmem:[%s796 + $0x38] sm:$0xff]
        %v805 = vld [vmem:[%s796 + $0x40] sm:$0xff]
        %v806 = vld [vmem:[%s796 + $0x48] sm:$0xff]
        %v807 = vld [vmem:[%s796 + $0x50] sm:$0xff]
        %v808 = vld [vmem:[%s796 + $0x58] sm:$0xff]
        %v809 = vld [vmem:[%s796 + $0x60] sm:$0xff]
        %v810 = vld [vmem:[%s796 + $0x68] sm:$0xff]
        %v811 = vld [vmem:[%s796 + $0x70] sm:$0xff]
        %v812 = vld [vmem:[%s796 + $0x78] sm:$0xff]
        %813 = vmatpush.msra.mxu0 %v812
        %814 = vmatpush.msra.mxu0 %v811
        %815 = vmatpush.msra.mxu0 %v810
        %816 = vmatpush.msra.mxu0 %v809
        %817 = vmatpush.msra.mxu0 %v808
        %818 = vmatpush.msra.mxu0 %v807
        %819 = vmatpush.msra.mxu0 %v806
        %820 = vmatpush.msra.mxu0 %v805
        %821 = vmatpush.msra.mxu0 %v804
        %822 = vmatpush.msra.mxu0 %v803
        %823 = vmatpush.msra.mxu0 %v802
        %824 = vmatpush.msra.mxu0 %v801
        %825 = vmatpush.msra.mxu0 %v800
        %826 = vmatpush.msra.mxu0 %v799
        %827 = vmatpush.msra.mxu0 %v798
        %828 = vmatpush.msra.mxu0 %v797
        %829 = vmatmul.f32.gmra.mxu0 %v786
        %v830 = vpop.f32.mrf.mxu0
        %v831 = vadd.f32 0.0, %v830
        %832 = vmatmul.f32.gmra.mxu0 %v787
        %v833 = vpop.f32.mrf.mxu0
        %v834 = vadd.f32 0.0, %v833
        %835 = vmatmul.f32.gmra.mxu0 %v788
        %v836 = vpop.f32.mrf.mxu0
        %v837 = vadd.f32 0.0, %v836
        %838 = vmatmul.f32.gmra.mxu0 %v789
        %v839 = vpop.f32.mrf.mxu0
        %v840 = vadd.f32 0.0, %v839
        %841 = vmatmul.f32.gmra.mxu0 %v790
        %v842 = vpop.f32.mrf.mxu0
        %v843 = vadd.f32 0.0, %v842
        %844 = vmatmul.f32.gmra.mxu0 %v791
        %v845 = vpop.f32.mrf.mxu0
        %v846 = vadd.f32 0.0, %v845
        %847 = vmatmul.f32.gmra.mxu0 %v792
        %v848 = vpop.f32.mrf.mxu0
        %v849 = vadd.f32 0.0, %v848
        %850 = vmatmul.f32.gmra.mxu0 %v793
        %v851 = vpop.f32.mrf.mxu0
        %v852 = vadd.f32 0.0, %v851
        %853 = vmatmul.f32.gmra.mxu0 %v794
        %v854 = vpop.f32.mrf.mxu0
        %v855 = vadd.f32 0.0, %v854
        %856 = vmatmul.f32.gmra.mxu0 %v795
        %v857 = vpop.f32.mrf.mxu0
        %v858 = vadd.f32 0.0, %v857
        %859 = vdwg.mxu0
        %v860 = vadd.f32 %v757, %v831
        %v861 = vadd.f32 %v760, %v834
        %v862 = vadd.f32 %v763, %v837
        %v863 = vadd.f32 %v766, %v840
        %v864 = vadd.f32 %v769, %v843
        %v865 = vadd.f32 %v772, %v846
        %v866 = vadd.f32 %v775, %v849
        %v867 = vadd.f32 %v778, %v852
        %v868 = vadd.f32 %v781, %v855
        %v869 = vadd.f32 %v784, %v858
        %v870 = vld [vmem:[%s240 + $0xa] sm:$0xff]
        %v871 = vld [vmem:[%s240 + $0x12] sm:$0xff]
        %v872 = vld [vmem:[%s240 + $0x1a] sm:$0xff]
        %v873 = vld [vmem:[%s240 + $0x22] sm:$0xff]
        %v874 = vld [vmem:[%s240 + $0x2a] sm:$0xff]
        %v875 = vld [vmem:[%s240 + $0x32] sm:$0xff]
        %v876 = vld [vmem:[%s240 + $0x3a] sm:$0xff]
        %v877 = vld [vmem:[%s240 + $0x42] sm:$0xff]
        %v878 = vld [vmem:[%s240 + $0x4a] sm:$0xff]
        %v879 = vld [vmem:[%s240 + $0x52] sm:$0xff]
        %s880 = scalar_lea.vmem [#allocation6], 384
        %v881 = vld [vmem:[%s880] sm:$0xff]
        %v882 = vld [vmem:[%s880 + $0x8] sm:$0xff]
        %v883 = vld [vmem:[%s880 + $0x10] sm:$0xff]
        %v884 = vld [vmem:[%s880 + $0x18] sm:$0xff]
        %v885 = vld [vmem:[%s880 + $0x20] sm:$0xff]
        %v886 = vld [vmem:[%s880 + $0x28] sm:$0xff]
        %v887 = vld [vmem:[%s880 + $0x30] sm:$0xff]
        %v888 = vld [vmem:[%s880 + $0x38] sm:$0xff]
        %v889 = vld [vmem:[%s880 + $0x40] sm:$0xff]
        %v890 = vld [vmem:[%s880 + $0x48] sm:$0xff]
        %v891 = vld [vmem:[%s880 + $0x50] sm:$0xff]
        %v892 = vld [vmem:[%s880 + $0x58] sm:$0xff]
        %v893 = vld [vmem:[%s880 + $0x60] sm:$0xff]
        %v894 = vld [vmem:[%s880 + $0x68] sm:$0xff]
        %v895 = vld [vmem:[%s880 + $0x70] sm:$0xff]
        %v896 = vld [vmem:[%s880 + $0x78] sm:$0xff]
        %897 = vmatpush.msra.mxu0 %v896
        %898 = vmatpush.msra.mxu0 %v895
        %899 = vmatpush.msra.mxu0 %v894
        %900 = vmatpush.msra.mxu0 %v893
        %901 = vmatpush.msra.mxu0 %v892
        %902 = vmatpush.msra.mxu0 %v891
        %903 = vmatpush.msra.mxu0 %v890
        %904 = vmatpush.msra.mxu0 %v889
        %905 = vmatpush.msra.mxu0 %v888
        %906 = vmatpush.msra.mxu0 %v887
        %907 = vmatpush.msra.mxu0 %v886
        %908 = vmatpush.msra.mxu0 %v885
        %909 = vmatpush.msra.mxu0 %v884
        %910 = vmatpush.msra.mxu0 %v883
        %911 = vmatpush.msra.mxu0 %v882
        %912 = vmatpush.msra.mxu0 %v881
        %913 = vmatmul.f32.gmra.mxu0 %v870
        %v914 = vpop.f32.mrf.mxu0
        %v915 = vadd.f32 0.0, %v914
        %916 = vmatmul.f32.gmra.mxu0 %v871
        %v917 = vpop.f32.mrf.mxu0
        %v918 = vadd.f32 0.0, %v917
        %919 = vmatmul.f32.gmra.mxu0 %v872
        %v920 = vpop.f32.mrf.mxu0
        %v921 = vadd.f32 0.0, %v920
        %922 = vmatmul.f32.gmra.mxu0 %v873
        %v923 = vpop.f32.mrf.mxu0
        %v924 = vadd.f32 0.0, %v923
        %925 = vmatmul.f32.gmra.mxu0 %v874
        %v926 = vpop.f32.mrf.mxu0
        %v927 = vadd.f32 0.0, %v926
        %928 = vmatmul.f32.gmra.mxu0 %v875
        %v929 = vpop.f32.mrf.mxu0
        %v930 = vadd.f32 0.0, %v929
        %931 = vmatmul.f32.gmra.mxu0 %v876
        %v932 = vpop.f32.mrf.mxu0
        %v933 = vadd.f32 0.0, %v932
        %934 = vmatmul.f32.gmra.mxu0 %v877
        %v935 = vpop.f32.mrf.mxu0
        %v936 = vadd.f32 0.0, %v935
        %937 = vmatmul.f32.gmra.mxu0 %v878
        %v938 = vpop.f32.mrf.mxu0
        %v939 = vadd.f32 0.0, %v938
        %940 = vmatmul.f32.gmra.mxu0 %v879
        %v941 = vpop.f32.mrf.mxu0
        %v942 = vadd.f32 0.0, %v941
        %943 = vdwg.mxu0
        %v944 = vadd.f32 %v860, %v915
        %v945 = vadd.f32 %v861, %v918
        %v946 = vadd.f32 %v862, %v921
        %v947 = vadd.f32 %v863, %v924
        %v948 = vadd.f32 %v864, %v927
        %v949 = vadd.f32 %v865, %v930
        %v950 = vadd.f32 %v866, %v933
        %v951 = vadd.f32 %v867, %v936
        %v952 = vadd.f32 %v868, %v939
        %v953 = vadd.f32 %v869, %v942
        %v954 = vld [vmem:[%s240 + $0xb] sm:$0xff]
        %v955 = vld [vmem:[%s240 + $0x13] sm:$0xff]
        %v956 = vld [vmem:[%s240 + $0x1b] sm:$0xff]
        %v957 = vld [vmem:[%s240 + $0x23] sm:$0xff]
        %v958 = vld [vmem:[%s240 + $0x2b] sm:$0xff]
        %v959 = vld [vmem:[%s240 + $0x33] sm:$0xff]
        %v960 = vld [vmem:[%s240 + $0x3b] sm:$0xff]
        %v961 = vld [vmem:[%s240 + $0x43] sm:$0xff]
        %v962 = vld [vmem:[%s240 + $0x4b] sm:$0xff]
        %v963 = vld [vmem:[%s240 + $0x53] sm:$0xff]
        %s964 = scalar_lea.vmem [#allocation6], 512
        %v965 = vld [vmem:[%s964] sm:$0xff]
        %v966 = vld [vmem:[%s964 + $0x8] sm:$0xff]
        %v967 = vld [vmem:[%s964 + $0x10] sm:$0xff]
        %v968 = vld [vmem:[%s964 + $0x18] sm:$0xff]
        %v969 = vld [vmem:[%s964 + $0x20] sm:$0xff]
        %v970 = vld [vmem:[%s964 + $0x28] sm:$0xff]
        %v971 = vld [vmem:[%s964 + $0x30] sm:$0xff]
        %v972 = vld [vmem:[%s964 + $0x38] sm:$0xff]
        %v973 = vld [vmem:[%s964 + $0x40] sm:$0xff]
        %v974 = vld [vmem:[%s964 + $0x48] sm:$0xff]
        %v975 = vld [vmem:[%s964 + $0x50] sm:$0xff]
        %v976 = vld [vmem:[%s964 + $0x58] sm:$0xff]
        %v977 = vld [vmem:[%s964 + $0x60] sm:$0xff]
        %v978 = vld [vmem:[%s964 + $0x68] sm:$0xff]
        %v979 = vld [vmem:[%s964 + $0x70] sm:$0xff]
        %v980 = vld [vmem:[%s964 + $0x78] sm:$0xff]
        %981 = vmatpush.msra.mxu0 %v980
        %982 = vmatpush.msra.mxu0 %v979
        %983 = vmatpush.msra.mxu0 %v978
        %984 = vmatpush.msra.mxu0 %v977
        %985 = vmatpush.msra.mxu0 %v976
        %986 = vmatpush.msra.mxu0 %v975
        %987 = vmatpush.msra.mxu0 %v974
        %988 = vmatpush.msra.mxu0 %v973
        %989 = vmatpush.msra.mxu0 %v972
        %990 = vmatpush.msra.mxu0 %v971
        %991 = vmatpush.msra.mxu0 %v970
        %992 = vmatpush.msra.mxu0 %v969
        %993 = vmatpush.msra.mxu0 %v968
        %994 = vmatpush.msra.mxu0 %v967
        %995 = vmatpush.msra.mxu0 %v966
        %996 = vmatpush.msra.mxu0 %v965
        %997 = vmatmul.f32.gmra.mxu0 %v954
        %v998 = vpop.f32.mrf.mxu0
        %v999 = vadd.f32 0.0, %v998
        %1000 = vmatmul.f32.gmra.mxu0 %v955
        %v1001 = vpop.f32.mrf.mxu0
        %v1002 = vadd.f32 0.0, %v1001
        %1003 = vmatmul.f32.gmra.mxu0 %v956
        %v1004 = vpop.f32.mrf.mxu0
        %v1005 = vadd.f32 0.0, %v1004
        %1006 = vmatmul.f32.gmra.mxu0 %v957
        %v1007 = vpop.f32.mrf.mxu0
        %v1008 = vadd.f32 0.0, %v1007
        %1009 = vmatmul.f32.gmra.mxu0 %v958
        %v1010 = vpop.f32.mrf.mxu0
        %v1011 = vadd.f32 0.0, %v1010
        %1012 = vmatmul.f32.gmra.mxu0 %v959
        %v1013 = vpop.f32.mrf.mxu0
        %v1014 = vadd.f32 0.0, %v1013
        %1015 = vmatmul.f32.gmra.mxu0 %v960
        %v1016 = vpop.f32.mrf.mxu0
        %v1017 = vadd.f32 0.0, %v1016
        %1018 = vmatmul.f32.gmra.mxu0 %v961
        %v1019 = vpop.f32.mrf.mxu0
        %v1020 = vadd.f32 0.0, %v1019
        %1021 = vmatmul.f32.gmra.mxu0 %v962
        %v1022 = vpop.f32.mrf.mxu0
        %v1023 = vadd.f32 0.0, %v1022
        %1024 = vmatmul.f32.gmra.mxu0 %v963
        %v1025 = vpop.f32.mrf.mxu0
        %v1026 = vadd.f32 0.0, %v1025
        %1027 = vdwg.mxu0
        %v1028 = vadd.f32 %v944, %v999
        %v1029 = vadd.f32 %v945, %v1002
        %v1030 = vadd.f32 %v946, %v1005
        %v1031 = vadd.f32 %v947, %v1008
        %v1032 = vadd.f32 %v948, %v1011
        %v1033 = vadd.f32 %v949, %v1014
        %v1034 = vadd.f32 %v950, %v1017
        %v1035 = vadd.f32 %v951, %v1020
        %v1036 = vadd.f32 %v952, %v1023
        %v1037 = vadd.f32 %v953, %v1026
        %v1038 = vld [vmem:[%s240 + $0xc] sm:$0xff]
        %v1039 = vld [vmem:[%s240 + $0x14] sm:$0xff]
        %v1040 = vld [vmem:[%s240 + $0x1c] sm:$0xff]
        %v1041 = vld [vmem:[%s240 + $0x24] sm:$0xff]
        %v1042 = vld [vmem:[%s240 + $0x2c] sm:$0xff]
        %v1043 = vld [vmem:[%s240 + $0x34] sm:$0xff]
        %v1044 = vld [vmem:[%s240 + $0x3c] sm:$0xff]
        %v1045 = vld [vmem:[%s240 + $0x44] sm:$0xff]
        %v1046 = vld [vmem:[%s240 + $0x4c] sm:$0xff]
        %v1047 = vld [vmem:[%s240 + $0x54] sm:$0xff]
        %s1048 = scalar_lea.vmem [#allocation6], 640
        %v1049 = vld [vmem:[%s1048] sm:$0xff]
        %v1050 = vld [vmem:[%s1048 + $0x8] sm:$0xff]
        %v1051 = vld [vmem:[%s1048 + $0x10] sm:$0xff]
        %v1052 = vld [vmem:[%s1048 + $0x18] sm:$0xff]
        %v1053 = vld [vmem:[%s1048 + $0x20] sm:$0xff]
        %v1054 = vld [vmem:[%s1048 + $0x28] sm:$0xff]
        %v1055 = vld [vmem:[%s1048 + $0x30] sm:$0xff]
        %v1056 = vld [vmem:[%s1048 + $0x38] sm:$0xff]
        %v1057 = vld [vmem:[%s1048 + $0x40] sm:$0xff]
        %v1058 = vld [vmem:[%s1048 + $0x48] sm:$0xff]
        %v1059 = vld [vmem:[%s1048 + $0x50] sm:$0xff]
        %v1060 = vld [vmem:[%s1048 + $0x58] sm:$0xff]
        %v1061 = vld [vmem:[%s1048 + $0x60] sm:$0xff]
        %v1062 = vld [vmem:[%s1048 + $0x68] sm:$0xff]
        %v1063 = vld [vmem:[%s1048 + $0x70] sm:$0xff]
        %v1064 = vld [vmem:[%s1048 + $0x78] sm:$0xff]
        %1065 = vmatpush.msra.mxu0 %v1064
        %1066 = vmatpush.msra.mxu0 %v1063
        %1067 = vmatpush.msra.mxu0 %v1062
        %1068 = vmatpush.msra.mxu0 %v1061
        %1069 = vmatpush.msra.mxu0 %v1060
        %1070 = vmatpush.msra.mxu0 %v1059
        %1071 = vmatpush.msra.mxu0 %v1058
        %1072 = vmatpush.msra.mxu0 %v1057
        %1073 = vmatpush.msra.mxu0 %v1056
        %1074 = vmatpush.msra.mxu0 %v1055
        %1075 = vmatpush.msra.mxu0 %v1054
        %1076 = vmatpush.msra.mxu0 %v1053
        %1077 = vmatpush.msra.mxu0 %v1052
        %1078 = vmatpush.msra.mxu0 %v1051
        %1079 = vmatpush.msra.mxu0 %v1050
        %1080 = vmatpush.msra.mxu0 %v1049
        %1081 = vmatmul.f32.gmra.mxu0 %v1038
        %v1082 = vpop.f32.mrf.mxu0
        %v1083 = vadd.f32 0.0, %v1082
        %1084 = vmatmul.f32.gmra.mxu0 %v1039
        %v1085 = vpop.f32.mrf.mxu0
        %v1086 = vadd.f32 0.0, %v1085
        %1087 = vmatmul.f32.gmra.mxu0 %v1040
        %v1088 = vpop.f32.mrf.mxu0
        %v1089 = vadd.f32 0.0, %v1088
        %1090 = vmatmul.f32.gmra.mxu0 %v1041
        %v1091 = vpop.f32.mrf.mxu0
        %v1092 = vadd.f32 0.0, %v1091
        %1093 = vmatmul.f32.gmra.mxu0 %v1042
        %v1094 = vpop.f32.mrf.mxu0
        %v1095 = vadd.f32 0.0, %v1094
        %1096 = vmatmul.f32.gmra.mxu0 %v1043
        %v1097 = vpop.f32.mrf.mxu0
        %v1098 = vadd.f32 0.0, %v1097
        %1099 = vmatmul.f32.gmra.mxu0 %v1044
        %v1100 = vpop.f32.mrf.mxu0
        %v1101 = vadd.f32 0.0, %v1100
        %1102 = vmatmul.f32.gmra.mxu0 %v1045
        %v1103 = vpop.f32.mrf.mxu0
        %v1104 = vadd.f32 0.0, %v1103
        %1105 = vmatmul.f32.gmra.mxu0 %v1046
        %v1106 = vpop.f32.mrf.mxu0
        %v1107 = vadd.f32 0.0, %v1106
        %1108 = vmatmul.f32.gmra.mxu0 %v1047
        %v1109 = vpop.f32.mrf.mxu0
        %v1110 = vadd.f32 0.0, %v1109
        %1111 = vdwg.mxu0
        %v1112 = vadd.f32 %v1028, %v1083
        %v1113 = vadd.f32 %v1029, %v1086
        %v1114 = vadd.f32 %v1030, %v1089
        %v1115 = vadd.f32 %v1031, %v1092
        %v1116 = vadd.f32 %v1032, %v1095
        %v1117 = vadd.f32 %v1033, %v1098
        %v1118 = vadd.f32 %v1034, %v1101
        %v1119 = vadd.f32 %v1035, %v1104
        %v1120 = vadd.f32 %v1036, %v1107
        %v1121 = vadd.f32 %v1037, %v1110
        %v1122 = vld [vmem:[%s240 + $0x14] sm:$0xff]
        %v1123 = vld [vmem:[%s240 + $0x1c] sm:$0xff]
        %v1124 = vld [vmem:[%s240 + $0x24] sm:$0xff]
        %v1125 = vld [vmem:[%s240 + $0x2c] sm:$0xff]
        %v1126 = vld [vmem:[%s240 + $0x34] sm:$0xff]
        %v1127 = vld [vmem:[%s240 + $0x3c] sm:$0xff]
        %v1128 = vld [vmem:[%s240 + $0x44] sm:$0xff]
        %v1129 = vld [vmem:[%s240 + $0x4c] sm:$0xff]
        %v1130 = vld [vmem:[%s240 + $0x54] sm:$0xff]
        %v1131 = vld [vmem:[%s240 + $0x5c] sm:$0xff]
        %s1132 = scalar_lea.vmem [#allocation6], 768
        %v1133 = vld [vmem:[%s1132] sm:$0xff]
        %v1134 = vld [vmem:[%s1132 + $0x8] sm:$0xff]
        %v1135 = vld [vmem:[%s1132 + $0x10] sm:$0xff]
        %v1136 = vld [vmem:[%s1132 + $0x18] sm:$0xff]
        %v1137 = vld [vmem:[%s1132 + $0x20] sm:$0xff]
        %v1138 = vld [vmem:[%s1132 + $0x28] sm:$0xff]
        %v1139 = vld [vmem:[%s1132 + $0x30] sm:$0xff]
        %v1140 = vld [vmem:[%s1132 + $0x38] sm:$0xff]
        %v1141 = vld [vmem:[%s1132 + $0x40] sm:$0xff]
        %v1142 = vld [vmem:[%s1132 + $0x48] sm:$0xff]
        %v1143 = vld [vmem:[%s1132 + $0x50] sm:$0xff]
        %v1144 = vld [vmem:[%s1132 + $0x58] sm:$0xff]
        %v1145 = vld [vmem:[%s1132 + $0x60] sm:$0xff]
        %v1146 = vld [vmem:[%s1132 + $0x68] sm:$0xff]
        %v1147 = vld [vmem:[%s1132 + $0x70] sm:$0xff]
        %v1148 = vld [vmem:[%s1132 + $0x78] sm:$0xff]
        %1149 = vmatpush.msra.mxu0 %v1148
        %1150 = vmatpush.msra.mxu0 %v1147
        %1151 = vmatpush.msra.mxu0 %v1146
        %1152 = vmatpush.msra.mxu0 %v1145
        %1153 = vmatpush.msra.mxu0 %v1144
        %1154 = vmatpush.msra.mxu0 %v1143
        %1155 = vmatpush.msra.mxu0 %v1142
        %1156 = vmatpush.msra.mxu0 %v1141
        %1157 = vmatpush.msra.mxu0 %v1140
        %1158 = vmatpush.msra.mxu0 %v1139
        %1159 = vmatpush.msra.mxu0 %v1138
        %1160 = vmatpush.msra.mxu0 %v1137
        %1161 = vmatpush.msra.mxu0 %v1136
        %1162 = vmatpush.msra.mxu0 %v1135
        %1163 = vmatpush.msra.mxu0 %v1134
        %1164 = vmatpush.msra.mxu0 %v1133
        %1165 = vmatmul.f32.gmra.mxu0 %v1122
        %v1166 = vpop.f32.mrf.mxu0
        %v1167 = vadd.f32 0.0, %v1166
        %1168 = vmatmul.f32.gmra.mxu0 %v1123
        %v1169 = vpop.f32.mrf.mxu0
        %v1170 = vadd.f32 0.0, %v1169
        %1171 = vmatmul.f32.gmra.mxu0 %v1124
        %v1172 = vpop.f32.mrf.mxu0
        %v1173 = vadd.f32 0.0, %v1172
        %1174 = vmatmul.f32.gmra.mxu0 %v1125
        %v1175 = vpop.f32.mrf.mxu0
        %v1176 = vadd.f32 0.0, %v1175
        %1177 = vmatmul.f32.gmra.mxu0 %v1126
        %v1178 = vpop.f32.mrf.mxu0
        %v1179 = vadd.f32 0.0, %v1178
        %1180 = vmatmul.f32.gmra.mxu0 %v1127
        %v1181 = vpop.f32.mrf.mxu0
        %v1182 = vadd.f32 0.0, %v1181
        %1183 = vmatmul.f32.gmra.mxu0 %v1128
        %v1184 = vpop.f32.mrf.mxu0
        %v1185 = vadd.f32 0.0, %v1184
        %1186 = vmatmul.f32.gmra.mxu0 %v1129
        %v1187 = vpop.f32.mrf.mxu0
        %v1188 = vadd.f32 0.0, %v1187
        %1189 = vmatmul.f32.gmra.mxu0 %v1130
        %v1190 = vpop.f32.mrf.mxu0
        %v1191 = vadd.f32 0.0, %v1190
        %1192 = vmatmul.f32.gmra.mxu0 %v1131
        %v1193 = vpop.f32.mrf.mxu0
        %v1194 = vadd.f32 0.0, %v1193
        %1195 = vdwg.mxu0
        %v1196 = vadd.f32 %v1112, %v1167
        %v1197 = vadd.f32 %v1113, %v1170
        %v1198 = vadd.f32 %v1114, %v1173
        %v1199 = vadd.f32 %v1115, %v1176
        %v1200 = vadd.f32 %v1116, %v1179
        %v1201 = vadd.f32 %v1117, %v1182
        %v1202 = vadd.f32 %v1118, %v1185
        %v1203 = vadd.f32 %v1119, %v1188
        %v1204 = vadd.f32 %v1120, %v1191
        %v1205 = vadd.f32 %v1121, %v1194
        %v1206 = vld [vmem:[%s240 + $0x15] sm:$0xff]
        %v1207 = vld [vmem:[%s240 + $0x1d] sm:$0xff]
        %v1208 = vld [vmem:[%s240 + $0x25] sm:$0xff]
        %v1209 = vld [vmem:[%s240 + $0x2d] sm:$0xff]
        %v1210 = vld [vmem:[%s240 + $0x35] sm:$0xff]
        %v1211 = vld [vmem:[%s240 + $0x3d] sm:$0xff]
        %v1212 = vld [vmem:[%s240 + $0x45] sm:$0xff]
        %v1213 = vld [vmem:[%s240 + $0x4d] sm:$0xff]
        %v1214 = vld [vmem:[%s240 + $0x55] sm:$0xff]
        %v1215 = vld [vmem:[%s240 + $0x5d] sm:$0xff]
        %s1216 = scalar_lea.vmem [#allocation6], 896
        %v1217 = vld [vmem:[%s1216] sm:$0xff]
        %v1218 = vld [vmem:[%s1216 + $0x8] sm:$0xff]
        %v1219 = vld [vmem:[%s1216 + $0x10] sm:$0xff]
        %v1220 = vld [vmem:[%s1216 + $0x18] sm:$0xff]
        %v1221 = vld [vmem:[%s1216 + $0x20] sm:$0xff]
        %v1222 = vld [vmem:[%s1216 + $0x28] sm:$0xff]
        %v1223 = vld [vmem:[%s1216 + $0x30] sm:$0xff]
        %v1224 = vld [vmem:[%s1216 + $0x38] sm:$0xff]
        %v1225 = vld [vmem:[%s1216 + $0x40] sm:$0xff]
        %v1226 = vld [vmem:[%s1216 + $0x48] sm:$0xff]
        %v1227 = vld [vmem:[%s1216 + $0x50] sm:$0xff]
        %v1228 = vld [vmem:[%s1216 + $0x58] sm:$0xff]
        %v1229 = vld [vmem:[%s1216 + $0x60] sm:$0xff]
        %v1230 = vld [vmem:[%s1216 + $0x68] sm:$0xff]
        %v1231 = vld [vmem:[%s1216 + $0x70] sm:$0xff]
        %v1232 = vld [vmem:[%s1216 + $0x78] sm:$0xff]
        %1233 = vmatpush.msra.mxu0 %v1232
        %1234 = vmatpush.msra.mxu0 %v1231
        %1235 = vmatpush.msra.mxu0 %v1230
        %1236 = vmatpush.msra.mxu0 %v1229
        %1237 = vmatpush.msra.mxu0 %v1228
        %1238 = vmatpush.msra.mxu0 %v1227
        %1239 = vmatpush.msra.mxu0 %v1226
        %1240 = vmatpush.msra.mxu0 %v1225
        %1241 = vmatpush.msra.mxu0 %v1224
        %1242 = vmatpush.msra.mxu0 %v1223
        %1243 = vmatpush.msra.mxu0 %v1222
        %1244 = vmatpush.msra.mxu0 %v1221
        %1245 = vmatpush.msra.mxu0 %v1220
        %1246 = vmatpush.msra.mxu0 %v1219
        %1247 = vmatpush.msra.mxu0 %v1218
        %1248 = vmatpush.msra.mxu0 %v1217
        %1249 = vmatmul.f32.gmra.mxu0 %v1206
        %v1250 = vpop.f32.mrf.mxu0
        %v1251 = vadd.f32 0.0, %v1250
        %1252 = vmatmul.f32.gmra.mxu0 %v1207
        %v1253 = vpop.f32.mrf.mxu0
        %v1254 = vadd.f32 0.0, %v1253
        %1255 = vmatmul.f32.gmra.mxu0 %v1208
        %v1256 = vpop.f32.mrf.mxu0
        %v1257 = vadd.f32 0.0, %v1256
        %1258 = vmatmul.f32.gmra.mxu0 %v1209
        %v1259 = vpop.f32.mrf.mxu0
        %v1260 = vadd.f32 0.0, %v1259
        %1261 = vmatmul.f32.gmra.mxu0 %v1210
        %v1262 = vpop.f32.mrf.mxu0
        %v1263 = vadd.f32 0.0, %v1262
        %1264 = vmatmul.f32.gmra.mxu0 %v1211
        %v1265 = vpop.f32.mrf.mxu0
        %v1266 = vadd.f32 0.0, %v1265
        %1267 = vmatmul.f32.gmra.mxu0 %v1212
        %v1268 = vpop.f32.mrf.mxu0
        %v1269 = vadd.f32 0.0, %v1268
        %1270 = vmatmul.f32.gmra.mxu0 %v1213
        %v1271 = vpop.f32.mrf.mxu0
        %v1272 = vadd.f32 0.0, %v1271
        %1273 = vmatmul.f32.gmra.mxu0 %v1214
        %v1274 = vpop.f32.mrf.mxu0
        %v1275 = vadd.f32 0.0, %v1274
        %1276 = vmatmul.f32.gmra.mxu0 %v1215
        %v1277 = vpop.f32.mrf.mxu0
        %v1278 = vadd.f32 0.0, %v1277
        %1279 = vdwg.mxu0
        %v1280 = vadd.f32 %v1196, %v1251
        %v1281 = vadd.f32 %v1197, %v1254
        %v1282 = vadd.f32 %v1198, %v1257
        %v1283 = vadd.f32 %v1199, %v1260
        %v1284 = vadd.f32 %v1200, %v1263
        %v1285 = vadd.f32 %v1201, %v1266
        %v1286 = vadd.f32 %v1202, %v1269
        %v1287 = vadd.f32 %v1203, %v1272
        %v1288 = vadd.f32 %v1204, %v1275
        %v1289 = vadd.f32 %v1205, %v1278
        %v1290 = vld [vmem:[%s240 + $0x16] sm:$0xff]
        %v1291 = vld [vmem:[%s240 + $0x1e] sm:$0xff]
        %v1292 = vld [vmem:[%s240 + $0x26] sm:$0xff]
        %v1293 = vld [vmem:[%s240 + $0x2e] sm:$0xff]
        %v1294 = vld [vmem:[%s240 + $0x36] sm:$0xff]
        %v1295 = vld [vmem:[%s240 + $0x3e] sm:$0xff]
        %v1296 = vld [vmem:[%s240 + $0x46] sm:$0xff]
        %v1297 = vld [vmem:[%s240 + $0x4e] sm:$0xff]
        %v1298 = vld [vmem:[%s240 + $0x56] sm:$0xff]
        %v1299 = vld [vmem:[%s240 + $0x5e] sm:$0xff]
        %s1300 = scalar_lea.vmem [#allocation6], 1024
        %v1301 = vld [vmem:[%s1300] sm:$0xff]
        %v1302 = vld [vmem:[%s1300 + $0x8] sm:$0xff]
        %v1303 = vld [vmem:[%s1300 + $0x10] sm:$0xff]
        %v1304 = vld [vmem:[%s1300 + $0x18] sm:$0xff]
        %v1305 = vld [vmem:[%s1300 + $0x20] sm:$0xff]
        %v1306 = vld [vmem:[%s1300 + $0x28] sm:$0xff]
        %v1307 = vld [vmem:[%s1300 + $0x30] sm:$0xff]
        %v1308 = vld [vmem:[%s1300 + $0x38] sm:$0xff]
        %v1309 = vld [vmem:[%s1300 + $0x40] sm:$0xff]
        %v1310 = vld [vmem:[%s1300 + $0x48] sm:$0xff]
        %v1311 = vld [vmem:[%s1300 + $0x50] sm:$0xff]
        %v1312 = vld [vmem:[%s1300 + $0x58] sm:$0xff]
        %v1313 = vld [vmem:[%s1300 + $0x60] sm:$0xff]
        %v1314 = vld [vmem:[%s1300 + $0x68] sm:$0xff]
        %v1315 = vld [vmem:[%s1300 + $0x70] sm:$0xff]
        %v1316 = vld [vmem:[%s1300 + $0x78] sm:$0xff]
        %1317 = vmatpush.msra.mxu0 %v1316
        %1318 = vmatpush.msra.mxu0 %v1315
        %1319 = vmatpush.msra.mxu0 %v1314
        %1320 = vmatpush.msra.mxu0 %v1313
        %1321 = vmatpush.msra.mxu0 %v1312
        %1322 = vmatpush.msra.mxu0 %v1311
        %1323 = vmatpush.msra.mxu0 %v1310
        %1324 = vmatpush.msra.mxu0 %v1309
        %1325 = vmatpush.msra.mxu0 %v1308
        %1326 = vmatpush.msra.mxu0 %v1307
        %1327 = vmatpush.msra.mxu0 %v1306
        %1328 = vmatpush.msra.mxu0 %v1305
        %1329 = vmatpush.msra.mxu0 %v1304
        %1330 = vmatpush.msra.mxu0 %v1303
        %1331 = vmatpush.msra.mxu0 %v1302
        %1332 = vmatpush.msra.mxu0 %v1301
        %1333 = vmatmul.f32.gmra.mxu0 %v1290
        %v1334 = vpop.f32.mrf.mxu0
        %v1335 = vadd.f32 0.0, %v1334
        %1336 = vmatmul.f32.gmra.mxu0 %v1291
        %v1337 = vpop.f32.mrf.mxu0
        %v1338 = vadd.f32 0.0, %v1337
        %1339 = vmatmul.f32.gmra.mxu0 %v1292
        %v1340 = vpop.f32.mrf.mxu0
        %v1341 = vadd.f32 0.0, %v1340
        %1342 = vmatmul.f32.gmra.mxu0 %v1293
        %v1343 = vpop.f32.mrf.mxu0
        %v1344 = vadd.f32 0.0, %v1343
        %1345 = vmatmul.f32.gmra.mxu0 %v1294
        %v1346 = vpop.f32.mrf.mxu0
        %v1347 = vadd.f32 0.0, %v1346
        %1348 = vmatmul.f32.gmra.mxu0 %v1295
        %v1349 = vpop.f32.mrf.mxu0
        %v1350 = vadd.f32 0.0, %v1349
        %1351 = vmatmul.f32.gmra.mxu0 %v1296
        %v1352 = vpop.f32.mrf.mxu0
        %v1353 = vadd.f32 0.0, %v1352
        %1354 = vmatmul.f32.gmra.mxu0 %v1297
        %v1355 = vpop.f32.mrf.mxu0
        %v1356 = vadd.f32 0.0, %v1355
        %1357 = vmatmul.f32.gmra.mxu0 %v1298
        %v1358 = vpop.f32.mrf.mxu0
        %v1359 = vadd.f32 0.0, %v1358
        %1360 = vmatmul.f32.gmra.mxu0 %v1299
        %v1361 = vpop.f32.mrf.mxu0
        %v1362 = vadd.f32 0.0, %v1361
        %1363 = vdwg.mxu0
        %v1364 = vadd.f32 %v1280, %v1335
        %v1365 = vadd.f32 %v1281, %v1338
        %v1366 = vadd.f32 %v1282, %v1341
        %v1367 = vadd.f32 %v1283, %v1344
        %v1368 = vadd.f32 %v1284, %v1347
        %v1369 = vadd.f32 %v1285, %v1350
        %v1370 = vadd.f32 %v1286, %v1353
        %v1371 = vadd.f32 %v1287, %v1356
        %v1372 = vadd.f32 %v1288, %v1359
        %v1373 = vadd.f32 %v1289, %v1362
        %v1374 = vld [vmem:[%s2] sm:$0x1]
        %v1376 = vperm.slane %v1374, 0
        %v1378 = vadd.f32 %v1364, %v1376
        %v1379 = vadd.f32 %v1365, %v1376
        %v1380 = vadd.f32 %v1366, %v1376
        %v1381 = vadd.f32 %v1367, %v1376
        %v1382 = vadd.f32 %v1368, %v1376
        %v1383 = vadd.f32 %v1369, %v1376
        %v1384 = vadd.f32 %v1370, %v1376
        %v1385 = vadd.f32 %v1371, %v1376
        %v1386 = vadd.f32 %v1372, %v1376
        %v1387 = vadd.f32 %v1373, %v1376
        %v1388 = vmax.f32 %v1378, 0.0
        %v1389 = vmax.f32 %v1379, 0.0
        %v1390 = vmax.f32 %v1380, 0.0
        %v1391 = vmax.f32 %v1381, 0.0
        %v1392 = vmax.f32 %v1382, 0.0
        %v1393 = vmax.f32 %v1383, 0.0
        %v1394 = vmax.f32 %v1384, 0.0
        %v1395 = vmax.f32 %v1385, 0.0
        %v1396 = vmax.f32 %v1386, 0.0
        %v1397 = vmax.f32 %v1387, 0.0
        %v1398 = vsel %vm629, 1, 0
        %v1399 = vsel %vm630, 1, 0
        %v1400 = vsel %vm631, 1, 0
        %v1401 = vsel %vm632, 1, 0
        %v1402 = vsel %vm633, 1, 0
        %v1403 = vsel %vm634, 1, 0
        %v1404 = vsel %vm635, 1, 0
        %v1405 = vsel %vm636, 1, 0
        %v1406 = vsel %vm637, 1, 0
        %v1407 = vsel %vm638, 1, 0
        %vm1408 = vcmp.eq.s32.totalorder %v1398, 1
        %vm1409 = vcmp.eq.s32.totalorder %v1399, 1
        %vm1410 = vcmp.eq.s32.totalorder %v1400, 1
        %vm1411 = vcmp.eq.s32.totalorder %v1401, 1
        %vm1412 = vcmp.eq.s32.totalorder %v1402, 1
        %vm1413 = vcmp.eq.s32.totalorder %v1403, 1
        %vm1414 = vcmp.eq.s32.totalorder %v1404, 1
        %vm1415 = vcmp.eq.s32.totalorder %v1405, 1
        %vm1416 = vcmp.eq.s32.totalorder %v1406, 1
        %vm1417 = vcmp.eq.s32.totalorder %v1407, 1
        %v1418 = vsel %vm1408, %v1388, 0.0
        %v1419 = vsel %vm1409, %v1389, 0.0
        %v1420 = vsel %vm1410, %v1390, 0.0
        %v1421 = vsel %vm1411, %v1391, 0.0
        %v1422 = vsel %vm1412, %v1392, 0.0
        %v1423 = vsel %vm1413, %v1393, 0.0
        %v1424 = vsel %vm1414, %v1394, 0.0
        %v1425 = vsel %vm1415, %v1395, 0.0
        %v1426 = vsel %vm1416, %v1396, 0.0
        %v1427 = vsel %vm1417, %v1397, 0.0
        %1428 = vst [vmem:[#allocation2] sm:$0xff] 0.0
        %1429 = vst [vmem:[#allocation2 + $0x8] sm:$0xff] 0.0
        %1430 = vst [vmem:[#allocation2 + $0x10] sm:$0xff] 0.0
        %1431 = vst [vmem:[#allocation2 + $0x18] sm:$0xff] 0.0
        %1432 = vst [vmem:[#allocation2 + $0x20] sm:$0xff] 0.0
        %1433 = vst [vmem:[#allocation2 + $0x28] sm:$0xff] 0.0
        %1434 = vst [vmem:[#allocation2 + $0x30] sm:$0xff] 0.0
        %1435 = vst [vmem:[#allocation2 + $0x38] sm:$0xff] 0.0
        %1436 = vst [vmem:[#allocation2 + $0x40] sm:$0xff] 0.0
        %1437 = vst [vmem:[#allocation2 + $0x48] sm:$0xff] 0.0
        %1438 = vst [vmem:[#allocation2 + $0x50] sm:$0xff] 0.0
        %1439 = vst [vmem:[#allocation2 + $0x58] sm:$0xff] 0.0
        %1440 = vst [vmem:[#allocation2 + $0x60] sm:$0xff] 0.0
        %1441 = vst [vmem:[#allocation2 + $0xb] sm:$0xff] %v1418
        %1442 = vst [vmem:[#allocation2 + $0x13] sm:$0xff] %v1419
        %1443 = vst [vmem:[#allocation2 + $0x1b] sm:$0xff] %v1420
        %1444 = vst [vmem:[#allocation2 + $0x23] sm:$0xff] %v1421
        %1445 = vst [vmem:[#allocation2 + $0x2b] sm:$0xff] %v1422
        %1446 = vst [vmem:[#allocation2 + $0x33] sm:$0xff] %v1423
        %1447 = vst [vmem:[#allocation2 + $0x3b] sm:$0xff] %v1424
        %1448 = vst [vmem:[#allocation2 + $0x43] sm:$0xff] %v1425
        %1449 = vst [vmem:[#allocation2 + $0x4b] sm:$0xff] %v1426
        %1450 = vst [vmem:[#allocation2 + $0x53] sm:$0xff] %v1427
        %v1451 = vld [vmem:[#allocation2] sm:$0xff]
        %v1452 = vld [vmem:[#allocation2 + $0x8] sm:$0xff]
        %v1453 = vld [vmem:[#allocation2 + $0x10] sm:$0xff]
        %v1454 = vld [vmem:[#allocation2 + $0x18] sm:$0xff]
        %v1455 = vld [vmem:[#allocation2 + $0x20] sm:$0xff]
        %v1456 = vld [vmem:[#allocation2 + $0x28] sm:$0xff]
        %v1457 = vld [vmem:[#allocation2 + $0x30] sm:$0xff]
        %v1458 = vld [vmem:[#allocation2 + $0x38] sm:$0xff]
        %v1459 = vld [vmem:[#allocation2 + $0x40] sm:$0xff]
        %v1460 = vld [vmem:[#allocation2 + $0x48] sm:$0xff]
        %v1461 = vld [vmem:[#allocation8] sm:$0xff]
        %v1462 = vld [vmem:[#allocation8 + $0x8] sm:$0xff]
        %v1463 = vld [vmem:[#allocation8 + $0x10] sm:$0xff]
        %v1464 = vld [vmem:[#allocation8 + $0x18] sm:$0xff]
        %v1465 = vld [vmem:[#allocation8 + $0x20] sm:$0xff]
        %v1466 = vld [vmem:[#allocation8 + $0x28] sm:$0xff]
        %v1467 = vld [vmem:[#allocation8 + $0x30] sm:$0xff]
        %v1468 = vld [vmem:[#allocation8 + $0x38] sm:$0xff]
        %v1469 = vld [vmem:[#allocation8 + $0x40] sm:$0xff]
        %v1470 = vld [vmem:[#allocation8 + $0x48] sm:$0xff]
        %v1471 = vld [vmem:[#allocation8 + $0x50] sm:$0xff]
        %v1472 = vld [vmem:[#allocation8 + $0x58] sm:$0xff]
        %v1473 = vld [vmem:[#allocation8 + $0x60] sm:$0xff]
        %v1474 = vld [vmem:[#allocation8 + $0x68] sm:$0xff]
        %v1475 = vld [vmem:[#allocation8 + $0x70] sm:$0xff]
        %v1476 = vld [vmem:[#allocation8 + $0x78] sm:$0xff]
        %v1477 = vld [vmem:[#allocation2 + $0x1] sm:$0xff]
        %v1478 = vld [vmem:[#allocation2 + $0x9] sm:$0xff]
        %v1479 = vld [vmem:[#allocation2 + $0x11] sm:$0xff]
        %v1480 = vld [vmem:[#allocation2 + $0x19] sm:$0xff]
        %v1481 = vld [vmem:[#allocation2 + $0x21] sm:$0xff]
        %v1482 = vld [vmem:[#allocation2 + $0x29] sm:$0xff]
        %v1483 = vld [vmem:[#allocation2 + $0x31] sm:$0xff]
        %v1484 = vld [vmem:[#allocation2 + $0x39] sm:$0xff]
        %v1485 = vld [vmem:[#allocation2 + $0x41] sm:$0xff]
        %v1486 = vld [vmem:[#allocation2 + $0x49] sm:$0xff]
        %s1487 = scalar_lea.vmem [#allocation8], 128
        %v1488 = vld [vmem:[%s1487] sm:$0xff]
        %v1489 = vld [vmem:[%s1487 + $0x8] sm:$0xff]
        %v1490 = vld [vmem:[%s1487 + $0x10] sm:$0xff]
        %v1491 = vld [vmem:[%s1487 + $0x18] sm:$0xff]
        %v1492 = vld [vmem:[%s1487 + $0x20] sm:$0xff]
        %v1493 = vld [vmem:[%s1487 + $0x28] sm:$0xff]
        %v1494 = vld [vmem:[%s1487 + $0x30] sm:$0xff]
        %v1495 = vld [vmem:[%s1487 + $0x38] sm:$0xff]
        %v1496 = vld [vmem:[%s1487 + $0x40] sm:$0xff]
        %v1497 = vld [vmem:[%s1487 + $0x48] sm:$0xff]
        %v1498 = vld [vmem:[%s1487 + $0x50] sm:$0xff]
        %v1499 = vld [vmem:[%s1487 + $0x58] sm:$0xff]
        %v1500 = vld [vmem:[%s1487 + $0x60] sm:$0xff]
        %v1501 = vld [vmem:[%s1487 + $0x68] sm:$0xff]
        %v1502 = vld [vmem:[%s1487 + $0x70] sm:$0xff]
        %v1503 = vld [vmem:[%s1487 + $0x78] sm:$0xff]
        %1504 = vmatpush.msra.mxu0 %v1503
        %1505 = vmatpush.msra.mxu0 %v1502
        %1506 = vmatpush.msra.mxu0 %v1501
        %1507 = vmatpush.msra.mxu0 %v1500
        %1508 = vmatpush.msra.mxu0 %v1499
        %1509 = vmatpush.msra.mxu0 %v1498
        %1510 = vmatpush.msra.mxu0 %v1497
        %1511 = vmatpush.msra.mxu0 %v1496
        %1512 = vmatpush.msra.mxu0 %v1495
        %1513 = vmatpush.msra.mxu0 %v1494
        %1514 = vmatpush.msra.mxu0 %v1493
        %1515 = vmatpush.msra.mxu0 %v1492
        %1516 = vmatpush.msra.mxu0 %v1491
        %1517 = vmatpush.msra.mxu0 %v1490
        %1518 = vmatpush.msra.mxu0 %v1489
        %1519 = vmatpush.msra.mxu0 %v1488
        %1520 = vmatmul.f32.gmra.mxu0 %v1477
        %v1521 = vpop.f32.mrf.mxu0
        %v1522 = vadd.f32 0.0, %v1521
        %1523 = vmatmul.f32.gmra.mxu0 %v1478
        %v1524 = vpop.f32.mrf.mxu0
        %v1525 = vadd.f32 0.0, %v1524
        %1526 = vmatmul.f32.gmra.mxu0 %v1479
        %v1527 = vpop.f32.mrf.mxu0
        %v1528 = vadd.f32 0.0, %v1527
        %1529 = vmatmul.f32.gmra.mxu0 %v1480
        %v1530 = vpop.f32.mrf.mxu0
        %v1531 = vadd.f32 0.0, %v1530
        %1532 = vmatmul.f32.gmra.mxu0 %v1481
        %v1533 = vpop.f32.mrf.mxu0
        %v1534 = vadd.f32 0.0, %v1533
        %1535 = vmatmul.f32.gmra.mxu0 %v1482
        %v1536 = vpop.f32.mrf.mxu0
        %v1537 = vadd.f32 0.0, %v1536
        %1538 = vmatmul.f32.gmra.mxu0 %v1483
        %v1539 = vpop.f32.mrf.mxu0
        %v1540 = vadd.f32 0.0, %v1539
        %1541 = vmatmul.f32.gmra.mxu0 %v1484
        %v1542 = vpop.f32.mrf.mxu0
        %v1543 = vadd.f32 0.0, %v1542
        %1544 = vmatmul.f32.gmra.mxu0 %v1485
        %v1545 = vpop.f32.mrf.mxu0
        %v1546 = vadd.f32 0.0, %v1545
        %1547 = vmatmul.f32.gmra.mxu0 %v1486
        %v1548 = vpop.f32.mrf.mxu0
        %v1549 = vadd.f32 0.0, %v1548
        %1550 = vdwg.mxu0
        %1551 = vmatpush.msra.mxu0 %v1476
        %1552 = vmatpush.msra.mxu0 %v1475
        %1553 = vmatpush.msra.mxu0 %v1474
        %1554 = vmatpush.msra.mxu0 %v1473
        %1555 = vmatpush.msra.mxu0 %v1472
        %1556 = vmatpush.msra.mxu0 %v1471
        %1557 = vmatpush.msra.mxu0 %v1470
        %1558 = vmatpush.msra.mxu0 %v1469
        %1559 = vmatpush.msra.mxu0 %v1468
        %1560 = vmatpush.msra.mxu0 %v1467
        %1561 = vmatpush.msra.mxu0 %v1466
        %1562 = vmatpush.msra.mxu0 %v1465
        %1563 = vmatpush.msra.mxu0 %v1464
        %1564 = vmatpush.msra.mxu0 %v1463
        %1565 = vmatpush.msra.mxu0 %v1462
        %1566 = vmatpush.msra.mxu0 %v1461
        %1567 = vmatmul.f32.gmra.mxu0 %v1451
        %v1568 = vpop.f32.mrf.mxu0
        %v1569 = vadd.f32 %v1522, %v1568
        %1570 = vmatmul.f32.gmra.mxu0 %v1452
        %v1571 = vpop.f32.mrf.mxu0
        %v1572 = vadd.f32 %v1525, %v1571
        %1573 = vmatmul.f32.gmra.mxu0 %v1453
        %v1574 = vpop.f32.mrf.mxu0
        %v1575 = vadd.f32 %v1528, %v1574
        %1576 = vmatmul.f32.gmra.mxu0 %v1454
        %v1577 = vpop.f32.mrf.mxu0
        %v1578 = vadd.f32 %v1531, %v1577
        %1579 = vmatmul.f32.gmra.mxu0 %v1455
        %v1580 = vpop.f32.mrf.mxu0
        %v1581 = vadd.f32 %v1534, %v1580
        %1582 = vmatmul.f32.gmra.mxu0 %v1456
        %v1583 = vpop.f32.mrf.mxu0
        %v1584 = vadd.f32 %v1537, %v1583
        %1585 = vmatmul.f32.gmra.mxu0 %v1457
        %v1586 = vpop.f32.mrf.mxu0
        %v1587 = vadd.f32 %v1540, %v1586
        %1588 = vmatmul.f32.gmra.mxu0 %v1458
        %v1589 = vpop.f32.mrf.mxu0
        %v1590 = vadd.f32 %v1543, %v1589
        %1591 = vmatmul.f32.gmra.mxu0 %v1459
        %v1592 = vpop.f32.mrf.mxu0
        %v1593 = vadd.f32 %v1546, %v1592
        %1594 = vmatmul.f32.gmra.mxu0 %v1460
        %v1595 = vpop.f32.mrf.mxu0
        %v1596 = vadd.f32 %v1549, %v1595
        %1597 = vdwg.mxu0
        %v1598 = vld [vmem:[#allocation2 + $0x2] sm:$0xff]
        %v1599 = vld [vmem:[#allocation2 + $0xa] sm:$0xff]
        %v1600 = vld [vmem:[#allocation2 + $0x12] sm:$0xff]
        %v1601 = vld [vmem:[#allocation2 + $0x1a] sm:$0xff]
        %v1602 = vld [vmem:[#allocation2 + $0x22] sm:$0xff]
        %v1603 = vld [vmem:[#allocation2 + $0x2a] sm:$0xff]
        %v1604 = vld [vmem:[#allocation2 + $0x32] sm:$0xff]
        %v1605 = vld [vmem:[#allocation2 + $0x3a] sm:$0xff]
        %v1606 = vld [vmem:[#allocation2 + $0x42] sm:$0xff]
        %v1607 = vld [vmem:[#allocation2 + $0x4a] sm:$0xff]
        %s1608 = scalar_lea.vmem [#allocation8], 256
        %v1609 = vld [vmem:[%s1608] sm:$0xff]
        %v1610 = vld [vmem:[%s1608 + $0x8] sm:$0xff]
        %v1611 = vld [vmem:[%s1608 + $0x10] sm:$0xff]
        %v1612 = vld [vmem:[%s1608 + $0x18] sm:$0xff]
        %v1613 = vld [vmem:[%s1608 + $0x20] sm:$0xff]
        %v1614 = vld [vmem:[%s1608 + $0x28] sm:$0xff]
        %v1615 = vld [vmem:[%s1608 + $0x30] sm:$0xff]
        %v1616 = vld [vmem:[%s1608 + $0x38] sm:$0xff]
        %v1617 = vld [vmem:[%s1608 + $0x40] sm:$0xff]
        %v1618 = vld [vmem:[%s1608 + $0x48] sm:$0xff]
        %v1619 = vld [vmem:[%s1608 + $0x50] sm:$0xff]
        %v1620 = vld [vmem:[%s1608 + $0x58] sm:$0xff]
        %v1621 = vld [vmem:[%s1608 + $0x60] sm:$0xff]
        %v1622 = vld [vmem:[%s1608 + $0x68] sm:$0xff]
        %v1623 = vld [vmem:[%s1608 + $0x70] sm:$0xff]
        %v1624 = vld [vmem:[%s1608 + $0x78] sm:$0xff]
        %1625 = vmatpush.msra.mxu0 %v1624
        %1626 = vmatpush.msra.mxu0 %v1623
        %1627 = vmatpush.msra.mxu0 %v1622
        %1628 = vmatpush.msra.mxu0 %v1621
        %1629 = vmatpush.msra.mxu0 %v1620
        %1630 = vmatpush.msra.mxu0 %v1619
        %1631 = vmatpush.msra.mxu0 %v1618
        %1632 = vmatpush.msra.mxu0 %v1617
        %1633 = vmatpush.msra.mxu0 %v1616
        %1634 = vmatpush.msra.mxu0 %v1615
        %1635 = vmatpush.msra.mxu0 %v1614
        %1636 = vmatpush.msra.mxu0 %v1613
        %1637 = vmatpush.msra.mxu0 %v1612
        %1638 = vmatpush.msra.mxu0 %v1611
        %1639 = vmatpush.msra.mxu0 %v1610
        %1640 = vmatpush.msra.mxu0 %v1609
        %1641 = vmatmul.f32.gmra.mxu0 %v1598
        %v1642 = vpop.f32.mrf.mxu0
        %v1643 = vadd.f32 0.0, %v1642
        %1644 = vmatmul.f32.gmra.mxu0 %v1599
        %v1645 = vpop.f32.mrf.mxu0
        %v1646 = vadd.f32 0.0, %v1645
        %1647 = vmatmul.f32.gmra.mxu0 %v1600
        %v1648 = vpop.f32.mrf.mxu0
        %v1649 = vadd.f32 0.0, %v1648
        %1650 = vmatmul.f32.gmra.mxu0 %v1601
        %v1651 = vpop.f32.mrf.mxu0
        %v1652 = vadd.f32 0.0, %v1651
        %1653 = vmatmul.f32.gmra.mxu0 %v1602
        %v1654 = vpop.f32.mrf.mxu0
        %v1655 = vadd.f32 0.0, %v1654
        %1656 = vmatmul.f32.gmra.mxu0 %v1603
        %v1657 = vpop.f32.mrf.mxu0
        %v1658 = vadd.f32 0.0, %v1657
        %1659 = vmatmul.f32.gmra.mxu0 %v1604
        %v1660 = vpop.f32.mrf.mxu0
        %v1661 = vadd.f32 0.0, %v1660
        %1662 = vmatmul.f32.gmra.mxu0 %v1605
        %v1663 = vpop.f32.mrf.mxu0
        %v1664 = vadd.f32 0.0, %v1663
        %1665 = vmatmul.f32.gmra.mxu0 %v1606
        %v1666 = vpop.f32.mrf.mxu0
        %v1667 = vadd.f32 0.0, %v1666
        %1668 = vmatmul.f32.gmra.mxu0 %v1607
        %v1669 = vpop.f32.mrf.mxu0
        %v1670 = vadd.f32 0.0, %v1669
        %1671 = vdwg.mxu0
        %v1672 = vadd.f32 %v1569, %v1643
        %v1673 = vadd.f32 %v1572, %v1646
        %v1674 = vadd.f32 %v1575, %v1649
        %v1675 = vadd.f32 %v1578, %v1652
        %v1676 = vadd.f32 %v1581, %v1655
        %v1677 = vadd.f32 %v1584, %v1658
        %v1678 = vadd.f32 %v1587, %v1661
        %v1679 = vadd.f32 %v1590, %v1664
        %v1680 = vadd.f32 %v1593, %v1667
        %v1681 = vadd.f32 %v1596, %v1670
        %v1682 = vld [vmem:[#allocation2 + $0xa] sm:$0xff]
        %v1683 = vld [vmem:[#allocation2 + $0x12] sm:$0xff]
        %v1684 = vld [vmem:[#allocation2 + $0x1a] sm:$0xff]
        %v1685 = vld [vmem:[#allocation2 + $0x22] sm:$0xff]
        %v1686 = vld [vmem:[#allocation2 + $0x2a] sm:$0xff]
        %v1687 = vld [vmem:[#allocation2 + $0x32] sm:$0xff]
        %v1688 = vld [vmem:[#allocation2 + $0x3a] sm:$0xff]
        %v1689 = vld [vmem:[#allocation2 + $0x42] sm:$0xff]
        %v1690 = vld [vmem:[#allocation2 + $0x4a] sm:$0xff]
        %v1691 = vld [vmem:[#allocation2 + $0x52] sm:$0xff]
        %s1692 = scalar_lea.vmem [#allocation8], 384
        %v1693 = vld [vmem:[%s1692] sm:$0xff]
        %v1694 = vld [vmem:[%s1692 + $0x8] sm:$0xff]
        %v1695 = vld [vmem:[%s1692 + $0x10] sm:$0xff]
        %v1696 = vld [vmem:[%s1692 + $0x18] sm:$0xff]
        %v1697 = vld [vmem:[%s1692 + $0x20] sm:$0xff]
        %v1698 = vld [vmem:[%s1692 + $0x28] sm:$0xff]
        %v1699 = vld [vmem:[%s1692 + $0x30] sm:$0xff]
        %v1700 = vld [vmem:[%s1692 + $0x38] sm:$0xff]
        %v1701 = vld [vmem:[%s1692 + $0x40] sm:$0xff]
        %v1702 = vld [vmem:[%s1692 + $0x48] sm:$0xff]
        %v1703 = vld [vmem:[%s1692 + $0x50] sm:$0xff]
        %v1704 = vld [vmem:[%s1692 + $0x58] sm:$0xff]
        %v1705 = vld [vmem:[%s1692 + $0x60] sm:$0xff]
        %v1706 = vld [vmem:[%s1692 + $0x68] sm:$0xff]
        %v1707 = vld [vmem:[%s1692 + $0x70] sm:$0xff]
        %v1708 = vld [vmem:[%s1692 + $0x78] sm:$0xff]
        %1709 = vmatpush.msra.mxu0 %v1708
        %1710 = vmatpush.msra.mxu0 %v1707
        %1711 = vmatpush.msra.mxu0 %v1706
        %1712 = vmatpush.msra.mxu0 %v1705
        %1713 = vmatpush.msra.mxu0 %v1704
        %1714 = vmatpush.msra.mxu0 %v1703
        %1715 = vmatpush.msra.mxu0 %v1702
        %1716 = vmatpush.msra.mxu0 %v1701
        %1717 = vmatpush.msra.mxu0 %v1700
        %1718 = vmatpush.msra.mxu0 %v1699
        %1719 = vmatpush.msra.mxu0 %v1698
        %1720 = vmatpush.msra.mxu0 %v1697
        %1721 = vmatpush.msra.mxu0 %v1696
        %1722 = vmatpush.msra.mxu0 %v1695
        %1723 = vmatpush.msra.mxu0 %v1694
        %1724 = vmatpush.msra.mxu0 %v1693
        %1725 = vmatmul.f32.gmra.mxu0 %v1682
        %v1726 = vpop.f32.mrf.mxu0
        %v1727 = vadd.f32 0.0, %v1726
        %1728 = vmatmul.f32.gmra.mxu0 %v1683
        %v1729 = vpop.f32.mrf.mxu0
        %v1730 = vadd.f32 0.0, %v1729
        %1731 = vmatmul.f32.gmra.mxu0 %v1684
        %v1732 = vpop.f32.mrf.mxu0
        %v1733 = vadd.f32 0.0, %v1732
        %1734 = vmatmul.f32.gmra.mxu0 %v1685
        %v1735 = vpop.f32.mrf.mxu0
        %v1736 = vadd.f32 0.0, %v1735
        %1737 = vmatmul.f32.gmra.mxu0 %v1686
        %v1738 = vpop.f32.mrf.mxu0
        %v1739 = vadd.f32 0.0, %v1738
        %1740 = vmatmul.f32.gmra.mxu0 %v1687
        %v1741 = vpop.f32.mrf.mxu0
        %v1742 = vadd.f32 0.0, %v1741
        %1743 = vmatmul.f32.gmra.mxu0 %v1688
        %v1744 = vpop.f32.mrf.mxu0
        %v1745 = vadd.f32 0.0, %v1744
        %1746 = vmatmul.f32.gmra.mxu0 %v1689
        %v1747 = vpop.f32.mrf.mxu0
        %v1748 = vadd.f32 0.0, %v1747
        %1749 = vmatmul.f32.gmra.mxu0 %v1690
        %v1750 = vpop.f32.mrf.mxu0
        %v1751 = vadd.f32 0.0, %v1750
        %1752 = vmatmul.f32.gmra.mxu0 %v1691
        %v1753 = vpop.f32.mrf.mxu0
        %v1754 = vadd.f32 0.0, %v1753
        %1755 = vdwg.mxu0
        %v1756 = vadd.f32 %v1672, %v1727
        %v1757 = vadd.f32 %v1673, %v1730
        %v1758 = vadd.f32 %v1674, %v1733
        %v1759 = vadd.f32 %v1675, %v1736
        %v1760 = vadd.f32 %v1676, %v1739
        %v1761 = vadd.f32 %v1677, %v1742
        %v1762 = vadd.f32 %v1678, %v1745
        %v1763 = vadd.f32 %v1679, %v1748
        %v1764 = vadd.f32 %v1680, %v1751
        %v1765 = vadd.f32 %v1681, %v1754
        %v1766 = vld [vmem:[#allocation2 + $0xb] sm:$0xff]
        %v1767 = vld [vmem:[#allocation2 + $0x13] sm:$0xff]
        %v1768 = vld [vmem:[#allocation2 + $0x1b] sm:$0xff]
        %v1769 = vld [vmem:[#allocation2 + $0x23] sm:$0xff]
        %v1770 = vld [vmem:[#allocation2 + $0x2b] sm:$0xff]
        %v1771 = vld [vmem:[#allocation2 + $0x33] sm:$0xff]
        %v1772 = vld [vmem:[#allocation2 + $0x3b] sm:$0xff]
        %v1773 = vld [vmem:[#allocation2 + $0x43] sm:$0xff]
        %v1774 = vld [vmem:[#allocation2 + $0x4b] sm:$0xff]
        %v1775 = vld [vmem:[#allocation2 + $0x53] sm:$0xff]
        %s1776 = scalar_lea.vmem [#allocation8], 512
        %v1777 = vld [vmem:[%s1776] sm:$0xff]
        %v1778 = vld [vmem:[%s1776 + $0x8] sm:$0xff]
        %v1779 = vld [vmem:[%s1776 + $0x10] sm:$0xff]
        %v1780 = vld [vmem:[%s1776 + $0x18] sm:$0xff]
        %v1781 = vld [vmem:[%s1776 + $0x20] sm:$0xff]
        %v1782 = vld [vmem:[%s1776 + $0x28] sm:$0xff]
        %v1783 = vld [vmem:[%s1776 + $0x30] sm:$0xff]
        %v1784 = vld [vmem:[%s1776 + $0x38] sm:$0xff]
        %v1785 = vld [vmem:[%s1776 + $0x40] sm:$0xff]
        %v1786 = vld [vmem:[%s1776 + $0x48] sm:$0xff]
        %v1787 = vld [vmem:[%s1776 + $0x50] sm:$0xff]
        %v1788 = vld [vmem:[%s1776 + $0x58] sm:$0xff]
        %v1789 = vld [vmem:[%s1776 + $0x60] sm:$0xff]
        %v1790 = vld [vmem:[%s1776 + $0x68] sm:$0xff]
        %v1791 = vld [vmem:[%s1776 + $0x70] sm:$0xff]
        %v1792 = vld [vmem:[%s1776 + $0x78] sm:$0xff]
        %1793 = vmatpush.msra.mxu0 %v1792
        %1794 = vmatpush.msra.mxu0 %v1791
        %1795 = vmatpush.msra.mxu0 %v1790
        %1796 = vmatpush.msra.mxu0 %v1789
        %1797 = vmatpush.msra.mxu0 %v1788
        %1798 = vmatpush.msra.mxu0 %v1787
        %1799 = vmatpush.msra.mxu0 %v1786
        %1800 = vmatpush.msra.mxu0 %v1785
        %1801 = vmatpush.msra.mxu0 %v1784
        %1802 = vmatpush.msra.mxu0 %v1783
        %1803 = vmatpush.msra.mxu0 %v1782
        %1804 = vmatpush.msra.mxu0 %v1781
        %1805 = vmatpush.msra.mxu0 %v1780
        %1806 = vmatpush.msra.mxu0 %v1779
        %1807 = vmatpush.msra.mxu0 %v1778
        %1808 = vmatpush.msra.mxu0 %v1777
        %1809 = vmatmul.f32.gmra.mxu0 %v1766
        %v1810 = vpop.f32.mrf.mxu0
        %v1811 = vadd.f32 0.0, %v1810
        %1812 = vmatmul.f32.gmra.mxu0 %v1767
        %v1813 = vpop.f32.mrf.mxu0
        %v1814 = vadd.f32 0.0, %v1813
        %1815 = vmatmul.f32.gmra.mxu0 %v1768
        %v1816 = vpop.f32.mrf.mxu0
        %v1817 = vadd.f32 0.0, %v1816
        %1818 = vmatmul.f32.gmra.mxu0 %v1769
        %v1819 = vpop.f32.mrf.mxu0
        %v1820 = vadd.f32 0.0, %v1819
        %1821 = vmatmul.f32.gmra.mxu0 %v1770
        %v1822 = vpop.f32.mrf.mxu0
        %v1823 = vadd.f32 0.0, %v1822
        %1824 = vmatmul.f32.gmra.mxu0 %v1771
        %v1825 = vpop.f32.mrf.mxu0
        %v1826 = vadd.f32 0.0, %v1825
        %1827 = vmatmul.f32.gmra.mxu0 %v1772
        %v1828 = vpop.f32.mrf.mxu0
        %v1829 = vadd.f32 0.0, %v1828
        %1830 = vmatmul.f32.gmra.mxu0 %v1773
        %v1831 = vpop.f32.mrf.mxu0
        %v1832 = vadd.f32 0.0, %v1831
        %1833 = vmatmul.f32.gmra.mxu0 %v1774
        %v1834 = vpop.f32.mrf.mxu0
        %v1835 = vadd.f32 0.0, %v1834
        %1836 = vmatmul.f32.gmra.mxu0 %v1775
        %v1837 = vpop.f32.mrf.mxu0
        %v1838 = vadd.f32 0.0, %v1837
        %1839 = vdwg.mxu0
        %v1840 = vadd.f32 %v1756, %v1811
        %v1841 = vadd.f32 %v1757, %v1814
        %v1842 = vadd.f32 %v1758, %v1817
        %v1843 = vadd.f32 %v1759, %v1820
        %v1844 = vadd.f32 %v1760, %v1823
        %v1845 = vadd.f32 %v1761, %v1826
        %v1846 = vadd.f32 %v1762, %v1829
        %v1847 = vadd.f32 %v1763, %v1832
        %v1848 = vadd.f32 %v1764, %v1835
        %v1849 = vadd.f32 %v1765, %v1838
        %v1850 = vld [vmem:[#allocation2 + $0xc] sm:$0xff]
        %v1851 = vld [vmem:[#allocation2 + $0x14] sm:$0xff]
        %v1852 = vld [vmem:[#allocation2 + $0x1c] sm:$0xff]
        %v1853 = vld [vmem:[#allocation2 + $0x24] sm:$0xff]
        %v1854 = vld [vmem:[#allocation2 + $0x2c] sm:$0xff]
        %v1855 = vld [vmem:[#allocation2 + $0x34] sm:$0xff]
        %v1856 = vld [vmem:[#allocation2 + $0x3c] sm:$0xff]
        %v1857 = vld [vmem:[#allocation2 + $0x44] sm:$0xff]
        %v1858 = vld [vmem:[#allocation2 + $0x4c] sm:$0xff]
        %v1859 = vld [vmem:[#allocation2 + $0x54] sm:$0xff]
        %s1860 = scalar_lea.vmem [#allocation8], 640
        %v1861 = vld [vmem:[%s1860] sm:$0xff]
        %v1862 = vld [vmem:[%s1860 + $0x8] sm:$0xff]
        %v1863 = vld [vmem:[%s1860 + $0x10] sm:$0xff]
        %v1864 = vld [vmem:[%s1860 + $0x18] sm:$0xff]
        %v1865 = vld [vmem:[%s1860 + $0x20] sm:$0xff]
        %v1866 = vld [vmem:[%s1860 + $0x28] sm:$0xff]
        %v1867 = vld [vmem:[%s1860 + $0x30] sm:$0xff]
        %v1868 = vld [vmem:[%s1860 + $0x38] sm:$0xff]
        %v1869 = vld [vmem:[%s1860 + $0x40] sm:$0xff]
        %v1870 = vld [vmem:[%s1860 + $0x48] sm:$0xff]
        %v1871 = vld [vmem:[%s1860 + $0x50] sm:$0xff]
        %v1872 = vld [vmem:[%s1860 + $0x58] sm:$0xff]
        %v1873 = vld [vmem:[%s1860 + $0x60] sm:$0xff]
        %v1874 = vld [vmem:[%s1860 + $0x68] sm:$0xff]
        %v1875 = vld [vmem:[%s1860 + $0x70] sm:$0xff]
        %v1876 = vld [vmem:[%s1860 + $0x78] sm:$0xff]
        %1877 = vmatpush.msra.mxu0 %v1876
        %1878 = vmatpush.msra.mxu0 %v1875
        %1879 = vmatpush.msra.mxu0 %v1874
        %1880 = vmatpush.msra.mxu0 %v1873
        %1881 = vmatpush.msra.mxu0 %v1872
        %1882 = vmatpush.msra.mxu0 %v1871
        %1883 = vmatpush.msra.mxu0 %v1870
        %1884 = vmatpush.msra.mxu0 %v1869
        %1885 = vmatpush.msra.mxu0 %v1868
        %1886 = vmatpush.msra.mxu0 %v1867
        %1887 = vmatpush.msra.mxu0 %v1866
        %1888 = vmatpush.msra.mxu0 %v1865
        %1889 = vmatpush.msra.mxu0 %v1864
        %1890 = vmatpush.msra.mxu0 %v1863
        %1891 = vmatpush.msra.mxu0 %v1862
        %1892 = vmatpush.msra.mxu0 %v1861
        %1893 = vmatmul.f32.gmra.mxu0 %v1850
        %v1894 = vpop.f32.mrf.mxu0
        %v1895 = vadd.f32 0.0, %v1894
        %1896 = vmatmul.f32.gmra.mxu0 %v1851
        %v1897 = vpop.f32.mrf.mxu0
        %v1898 = vadd.f32 0.0, %v1897
        %1899 = vmatmul.f32.gmra.mxu0 %v1852
        %v1900 = vpop.f32.mrf.mxu0
        %v1901 = vadd.f32 0.0, %v1900
        %1902 = vmatmul.f32.gmra.mxu0 %v1853
        %v1903 = vpop.f32.mrf.mxu0
        %v1904 = vadd.f32 0.0, %v1903
        %1905 = vmatmul.f32.gmra.mxu0 %v1854
        %v1906 = vpop.f32.mrf.mxu0
        %v1907 = vadd.f32 0.0, %v1906
        %1908 = vmatmul.f32.gmra.mxu0 %v1855
        %v1909 = vpop.f32.mrf.mxu0
        %v1910 = vadd.f32 0.0, %v1909
        %1911 = vmatmul.f32.gmra.mxu0 %v1856
        %v1912 = vpop.f32.mrf.mxu0
        %v1913 = vadd.f32 0.0, %v1912
        %1914 = vmatmul.f32.gmra.mxu0 %v1857
        %v1915 = vpop.f32.mrf.mxu0
        %v1916 = vadd.f32 0.0, %v1915
        %1917 = vmatmul.f32.gmra.mxu0 %v1858
        %v1918 = vpop.f32.mrf.mxu0
        %v1919 = vadd.f32 0.0, %v1918
        %1920 = vmatmul.f32.gmra.mxu0 %v1859
        %v1921 = vpop.f32.mrf.mxu0
        %v1922 = vadd.f32 0.0, %v1921
        %1923 = vdwg.mxu0
        %v1924 = vadd.f32 %v1840, %v1895
        %v1925 = vadd.f32 %v1841, %v1898
        %v1926 = vadd.f32 %v1842, %v1901
        %v1927 = vadd.f32 %v1843, %v1904
        %v1928 = vadd.f32 %v1844, %v1907
        %v1929 = vadd.f32 %v1845, %v1910
        %v1930 = vadd.f32 %v1846, %v1913
        %v1931 = vadd.f32 %v1847, %v1916
        %v1932 = vadd.f32 %v1848, %v1919
        %v1933 = vadd.f32 %v1849, %v1922
        %v1934 = vld [vmem:[#allocation2 + $0x14] sm:$0xff]
        %v1935 = vld [vmem:[#allocation2 + $0x1c] sm:$0xff]
        %v1936 = vld [vmem:[#allocation2 + $0x24] sm:$0xff]
        %v1937 = vld [vmem:[#allocation2 + $0x2c] sm:$0xff]
        %v1938 = vld [vmem:[#allocation2 + $0x34] sm:$0xff]
        %v1939 = vld [vmem:[#allocation2 + $0x3c] sm:$0xff]
        %v1940 = vld [vmem:[#allocation2 + $0x44] sm:$0xff]
        %v1941 = vld [vmem:[#allocation2 + $0x4c] sm:$0xff]
        %v1942 = vld [vmem:[#allocation2 + $0x54] sm:$0xff]
        %v1943 = vld [vmem:[#allocation2 + $0x5c] sm:$0xff]
        %s1944 = scalar_lea.vmem [#allocation8], 768
        %v1945 = vld [vmem:[%s1944] sm:$0xff]
        %v1946 = vld [vmem:[%s1944 + $0x8] sm:$0xff]
        %v1947 = vld [vmem:[%s1944 + $0x10] sm:$0xff]
        %v1948 = vld [vmem:[%s1944 + $0x18] sm:$0xff]
        %v1949 = vld [vmem:[%s1944 + $0x20] sm:$0xff]
        %v1950 = vld [vmem:[%s1944 + $0x28] sm:$0xff]
        %v1951 = vld [vmem:[%s1944 + $0x30] sm:$0xff]
        %v1952 = vld [vmem:[%s1944 + $0x38] sm:$0xff]
        %v1953 = vld [vmem:[%s1944 + $0x40] sm:$0xff]
        %v1954 = vld [vmem:[%s1944 + $0x48] sm:$0xff]
        %v1955 = vld [vmem:[%s1944 + $0x50] sm:$0xff]
        %v1956 = vld [vmem:[%s1944 + $0x58] sm:$0xff]
        %v1957 = vld [vmem:[%s1944 + $0x60] sm:$0xff]
        %v1958 = vld [vmem:[%s1944 + $0x68] sm:$0xff]
        %v1959 = vld [vmem:[%s1944 + $0x70] sm:$0xff]
        %v1960 = vld [vmem:[%s1944 + $0x78] sm:$0xff]
        %1961 = vmatpush.msra.mxu0 %v1960
        %1962 = vmatpush.msra.mxu0 %v1959
        %1963 = vmatpush.msra.mxu0 %v1958
        %1964 = vmatpush.msra.mxu0 %v1957
        %1965 = vmatpush.msra.mxu0 %v1956
        %1966 = vmatpush.msra.mxu0 %v1955
        %1967 = vmatpush.msra.mxu0 %v1954
        %1968 = vmatpush.msra.mxu0 %v1953
        %1969 = vmatpush.msra.mxu0 %v1952
        %1970 = vmatpush.msra.mxu0 %v1951
        %1971 = vmatpush.msra.mxu0 %v1950
        %1972 = vmatpush.msra.mxu0 %v1949
        %1973 = vmatpush.msra.mxu0 %v1948
        %1974 = vmatpush.msra.mxu0 %v1947
        %1975 = vmatpush.msra.mxu0 %v1946
        %1976 = vmatpush.msra.mxu0 %v1945
        %1977 = vmatmul.f32.gmra.mxu0 %v1934
        %v1978 = vpop.f32.mrf.mxu0
        %v1979 = vadd.f32 0.0, %v1978
        %1980 = vmatmul.f32.gmra.mxu0 %v1935
        %v1981 = vpop.f32.mrf.mxu0
        %v1982 = vadd.f32 0.0, %v1981
        %1983 = vmatmul.f32.gmra.mxu0 %v1936
        %v1984 = vpop.f32.mrf.mxu0
        %v1985 = vadd.f32 0.0, %v1984
        %1986 = vmatmul.f32.gmra.mxu0 %v1937
        %v1987 = vpop.f32.mrf.mxu0
        %v1988 = vadd.f32 0.0, %v1987
        %1989 = vmatmul.f32.gmra.mxu0 %v1938
        %v1990 = vpop.f32.mrf.mxu0
        %v1991 = vadd.f32 0.0, %v1990
        %1992 = vmatmul.f32.gmra.mxu0 %v1939
        %v1993 = vpop.f32.mrf.mxu0
        %v1994 = vadd.f32 0.0, %v1993
        %1995 = vmatmul.f32.gmra.mxu0 %v1940
        %v1996 = vpop.f32.mrf.mxu0
        %v1997 = vadd.f32 0.0, %v1996
        %1998 = vmatmul.f32.gmra.mxu0 %v1941
        %v1999 = vpop.f32.mrf.mxu0
        %v2000 = vadd.f32 0.0, %v1999
        %2001 = vmatmul.f32.gmra.mxu0 %v1942
        %v2002 = vpop.f32.mrf.mxu0
        %v2003 = vadd.f32 0.0, %v2002
        %2004 = vmatmul.f32.gmra.mxu0 %v1943
        %v2005 = vpop.f32.mrf.mxu0
        %v2006 = vadd.f32 0.0, %v2005
        %2007 = vdwg.mxu0
        %v2008 = vadd.f32 %v1924, %v1979
        %v2009 = vadd.f32 %v1925, %v1982
        %v2010 = vadd.f32 %v1926, %v1985
        %v2011 = vadd.f32 %v1927, %v1988
        %v2012 = vadd.f32 %v1928, %v1991
        %v2013 = vadd.f32 %v1929, %v1994
        %v2014 = vadd.f32 %v1930, %v1997
        %v2015 = vadd.f32 %v1931, %v2000
        %v2016 = vadd.f32 %v1932, %v2003
        %v2017 = vadd.f32 %v1933, %v2006
        %v2018 = vld [vmem:[#allocation2 + $0x15] sm:$0xff]
        %v2019 = vld [vmem:[#allocation2 + $0x1d] sm:$0xff]
        %v2020 = vld [vmem:[#allocation2 + $0x25] sm:$0xff]
        %v2021 = vld [vmem:[#allocation2 + $0x2d] sm:$0xff]
        %v2022 = vld [vmem:[#allocation2 + $0x35] sm:$0xff]
        %v2023 = vld [vmem:[#allocation2 + $0x3d] sm:$0xff]
        %v2024 = vld [vmem:[#allocation2 + $0x45] sm:$0xff]
        %v2025 = vld [vmem:[#allocation2 + $0x4d] sm:$0xff]
        %v2026 = vld [vmem:[#allocation2 + $0x55] sm:$0xff]
        %v2027 = vld [vmem:[#allocation2 + $0x5d] sm:$0xff]
        %s2028 = scalar_lea.vmem [#allocation8], 896
        %v2029 = vld [vmem:[%s2028] sm:$0xff]
        %v2030 = vld [vmem:[%s2028 + $0x8] sm:$0xff]
        %v2031 = vld [vmem:[%s2028 + $0x10] sm:$0xff]
        %v2032 = vld [vmem:[%s2028 + $0x18] sm:$0xff]
        %v2033 = vld [vmem:[%s2028 + $0x20] sm:$0xff]
        %v2034 = vld [vmem:[%s2028 + $0x28] sm:$0xff]
        %v2035 = vld [vmem:[%s2028 + $0x30] sm:$0xff]
        %v2036 = vld [vmem:[%s2028 + $0x38] sm:$0xff]
        %v2037 = vld [vmem:[%s2028 + $0x40] sm:$0xff]
        %v2038 = vld [vmem:[%s2028 + $0x48] sm:$0xff]
        %v2039 = vld [vmem:[%s2028 + $0x50] sm:$0xff]
        %v2040 = vld [vmem:[%s2028 + $0x58] sm:$0xff]
        %v2041 = vld [vmem:[%s2028 + $0x60] sm:$0xff]
        %v2042 = vld [vmem:[%s2028 + $0x68] sm:$0xff]
        %v2043 = vld [vmem:[%s2028 + $0x70] sm:$0xff]
        %v2044 = vld [vmem:[%s2028 + $0x78] sm:$0xff]
        %2045 = vmatpush.msra.mxu0 %v2044
        %2046 = vmatpush.msra.mxu0 %v2043
        %2047 = vmatpush.msra.mxu0 %v2042
        %2048 = vmatpush.msra.mxu0 %v2041
        %2049 = vmatpush.msra.mxu0 %v2040
        %2050 = vmatpush.msra.mxu0 %v2039
        %2051 = vmatpush.msra.mxu0 %v2038
        %2052 = vmatpush.msra.mxu0 %v2037
        %2053 = vmatpush.msra.mxu0 %v2036
        %2054 = vmatpush.msra.mxu0 %v2035
        %2055 = vmatpush.msra.mxu0 %v2034
        %2056 = vmatpush.msra.mxu0 %v2033
        %2057 = vmatpush.msra.mxu0 %v2032
        %2058 = vmatpush.msra.mxu0 %v2031
        %2059 = vmatpush.msra.mxu0 %v2030
        %2060 = vmatpush.msra.mxu0 %v2029
        %2061 = vmatmul.f32.gmra.mxu0 %v2018
        %v2062 = vpop.f32.mrf.mxu0
        %v2063 = vadd.f32 0.0, %v2062
        %2064 = vmatmul.f32.gmra.mxu0 %v2019
        %v2065 = vpop.f32.mrf.mxu0
        %v2066 = vadd.f32 0.0, %v2065
        %2067 = vmatmul.f32.gmra.mxu0 %v2020
        %v2068 = vpop.f32.mrf.mxu0
        %v2069 = vadd.f32 0.0, %v2068
        %2070 = vmatmul.f32.gmra.mxu0 %v2021
        %v2071 = vpop.f32.mrf.mxu0
        %v2072 = vadd.f32 0.0, %v2071
        %2073 = vmatmul.f32.gmra.mxu0 %v2022
        %v2074 = vpop.f32.mrf.mxu0
        %v2075 = vadd.f32 0.0, %v2074
        %2076 = vmatmul.f32.gmra.mxu0 %v2023
        %v2077 = vpop.f32.mrf.mxu0
        %v2078 = vadd.f32 0.0, %v2077
        %2079 = vmatmul.f32.gmra.mxu0 %v2024
        %v2080 = vpop.f32.mrf.mxu0
        %v2081 = vadd.f32 0.0, %v2080
        %2082 = vmatmul.f32.gmra.mxu0 %v2025
        %v2083 = vpop.f32.mrf.mxu0
        %v2084 = vadd.f32 0.0, %v2083
        %2085 = vmatmul.f32.gmra.mxu0 %v2026
        %v2086 = vpop.f32.mrf.mxu0
        %v2087 = vadd.f32 0.0, %v2086
        %2088 = vmatmul.f32.gmra.mxu0 %v2027
        %v2089 = vpop.f32.mrf.mxu0
        %v2090 = vadd.f32 0.0, %v2089
        %2091 = vdwg.mxu0
        %v2092 = vadd.f32 %v2008, %v2063
        %v2093 = vadd.f32 %v2009, %v2066
        %v2094 = vadd.f32 %v2010, %v2069
        %v2095 = vadd.f32 %v2011, %v2072
        %v2096 = vadd.f32 %v2012, %v2075
        %v2097 = vadd.f32 %v2013, %v2078
        %v2098 = vadd.f32 %v2014, %v2081
        %v2099 = vadd.f32 %v2015, %v2084
        %v2100 = vadd.f32 %v2016, %v2087
        %v2101 = vadd.f32 %v2017, %v2090
        %v2102 = vld [vmem:[#allocation2 + $0x16] sm:$0xff]
        %v2103 = vld [vmem:[#allocation2 + $0x1e] sm:$0xff]
        %v2104 = vld [vmem:[#allocation2 + $0x26] sm:$0xff]
        %v2105 = vld [vmem:[#allocation2 + $0x2e] sm:$0xff]
        %v2106 = vld [vmem:[#allocation2 + $0x36] sm:$0xff]
        %v2107 = vld [vmem:[#allocation2 + $0x3e] sm:$0xff]
        %v2108 = vld [vmem:[#allocation2 + $0x46] sm:$0xff]
        %v2109 = vld [vmem:[#allocation2 + $0x4e] sm:$0xff]
        %v2110 = vld [vmem:[#allocation2 + $0x56] sm:$0xff]
        %v2111 = vld [vmem:[#allocation2 + $0x5e] sm:$0xff]
        %s2112 = scalar_lea.vmem [#allocation8], 1024
        %v2113 = vld [vmem:[%s2112] sm:$0xff]
        %v2114 = vld [vmem:[%s2112 + $0x8] sm:$0xff]
        %v2115 = vld [vmem:[%s2112 + $0x10] sm:$0xff]
        %v2116 = vld [vmem:[%s2112 + $0x18] sm:$0xff]
        %v2117 = vld [vmem:[%s2112 + $0x20] sm:$0xff]
        %v2118 = vld [vmem:[%s2112 + $0x28] sm:$0xff]
        %v2119 = vld [vmem:[%s2112 + $0x30] sm:$0xff]
        %v2120 = vld [vmem:[%s2112 + $0x38] sm:$0xff]
        %v2121 = vld [vmem:[%s2112 + $0x40] sm:$0xff]
        %v2122 = vld [vmem:[%s2112 + $0x48] sm:$0xff]
        %v2123 = vld [vmem:[%s2112 + $0x50] sm:$0xff]
        %v2124 = vld [vmem:[%s2112 + $0x58] sm:$0xff]
        %v2125 = vld [vmem:[%s2112 + $0x60] sm:$0xff]
        %v2126 = vld [vmem:[%s2112 + $0x68] sm:$0xff]
        %v2127 = vld [vmem:[%s2112 + $0x70] sm:$0xff]
        %v2128 = vld [vmem:[%s2112 + $0x78] sm:$0xff]
        %2129 = vmatpush.msra.mxu0 %v2128
        %2130 = vmatpush.msra.mxu0 %v2127
        %2131 = vmatpush.msra.mxu0 %v2126
        %2132 = vmatpush.msra.mxu0 %v2125
        %2133 = vmatpush.msra.mxu0 %v2124
        %2134 = vmatpush.msra.mxu0 %v2123
        %2135 = vmatpush.msra.mxu0 %v2122
        %2136 = vmatpush.msra.mxu0 %v2121
        %2137 = vmatpush.msra.mxu0 %v2120
        %2138 = vmatpush.msra.mxu0 %v2119
        %2139 = vmatpush.msra.mxu0 %v2118
        %2140 = vmatpush.msra.mxu0 %v2117
        %2141 = vmatpush.msra.mxu0 %v2116
        %2142 = vmatpush.msra.mxu0 %v2115
        %2143 = vmatpush.msra.mxu0 %v2114
        %2144 = vmatpush.msra.mxu0 %v2113
        %2145 = vmatmul.f32.gmra.mxu0 %v2102
        %v2146 = vpop.f32.mrf.mxu0
        %v2147 = vadd.f32 0.0, %v2146
        %2148 = vmatmul.f32.gmra.mxu0 %v2103
        %v2149 = vpop.f32.mrf.mxu0
        %v2150 = vadd.f32 0.0, %v2149
        %2151 = vmatmul.f32.gmra.mxu0 %v2104
        %v2152 = vpop.f32.mrf.mxu0
        %v2153 = vadd.f32 0.0, %v2152
        %2154 = vmatmul.f32.gmra.mxu0 %v2105
        %v2155 = vpop.f32.mrf.mxu0
        %v2156 = vadd.f32 0.0, %v2155
        %2157 = vmatmul.f32.gmra.mxu0 %v2106
        %v2158 = vpop.f32.mrf.mxu0
        %v2159 = vadd.f32 0.0, %v2158
        %2160 = vmatmul.f32.gmra.mxu0 %v2107
        %v2161 = vpop.f32.mrf.mxu0
        %v2162 = vadd.f32 0.0, %v2161
        %2163 = vmatmul.f32.gmra.mxu0 %v2108
        %v2164 = vpop.f32.mrf.mxu0
        %v2165 = vadd.f32 0.0, %v2164
        %2166 = vmatmul.f32.gmra.mxu0 %v2109
        %v2167 = vpop.f32.mrf.mxu0
        %v2168 = vadd.f32 0.0, %v2167
        %2169 = vmatmul.f32.gmra.mxu0 %v2110
        %v2170 = vpop.f32.mrf.mxu0
        %v2171 = vadd.f32 0.0, %v2170
        %2172 = vmatmul.f32.gmra.mxu0 %v2111
        %v2173 = vpop.f32.mrf.mxu0
        %v2174 = vadd.f32 0.0, %v2173
        %2175 = vdwg.mxu0
        %v2176 = vadd.f32 %v2092, %v2147
        %v2177 = vadd.f32 %v2093, %v2150
        %v2178 = vadd.f32 %v2094, %v2153
        %v2179 = vadd.f32 %v2095, %v2156
        %v2180 = vadd.f32 %v2096, %v2159
        %v2181 = vadd.f32 %v2097, %v2162
        %v2182 = vadd.f32 %v2098, %v2165
        %v2183 = vadd.f32 %v2099, %v2168
        %v2184 = vadd.f32 %v2100, %v2171
        %v2185 = vadd.f32 %v2101, %v2174
        %v2186 = vld [vmem:[%s4] sm:$0x1]
        %v2188 = vperm.slane %v2186, 0
        %v2190 = vadd.f32 %v2176, %v2188
        %v2191 = vadd.f32 %v2177, %v2188
        %v2192 = vadd.f32 %v2178, %v2188
        %v2193 = vadd.f32 %v2179, %v2188
        %v2194 = vadd.f32 %v2180, %v2188
        %v2195 = vadd.f32 %v2181, %v2188
        %v2196 = vadd.f32 %v2182, %v2188
        %v2197 = vadd.f32 %v2183, %v2188
        %v2198 = vadd.f32 %v2184, %v2188
        %v2199 = vadd.f32 %v2185, %v2188
        %v2200 = vmax.f32 %v2190, 0.0
        %v2201 = vmax.f32 %v2191, 0.0
        %v2202 = vmax.f32 %v2192, 0.0
        %v2203 = vmax.f32 %v2193, 0.0
        %v2204 = vmax.f32 %v2194, 0.0
        %v2205 = vmax.f32 %v2195, 0.0
        %v2206 = vmax.f32 %v2196, 0.0
        %v2207 = vmax.f32 %v2197, 0.0
        %v2208 = vmax.f32 %v2198, 0.0
        %v2209 = vmax.f32 %v2199, 0.0
        %2210 = vst [vmem:[%s277] sm:$0xff] %v2200
        %2211 = vst [vmem:[%s277 + $0x8] sm:$0xff] %v2201
        %2212 = vst [vmem:[%s277 + $0x10] sm:$0xff] %v2202
        %2213 = vst [vmem:[%s277 + $0x18] sm:$0xff] %v2203
        %2214 = vst [vmem:[%s277 + $0x20] sm:$0xff] %v2204
        %2215 = vst [vmem:[%s277 + $0x28] sm:$0xff] %v2205
        %2216 = vst [vmem:[%s277 + $0x30] sm:$0xff] %v2206
        %2217 = vst [vmem:[%s277 + $0x38] sm:$0xff] %v2207
        %2218 = vst [vmem:[%s277 + $0x40] sm:$0xff] %v2208
        %2219 = vst [vmem:[%s277 + $0x48] sm:$0xff] %v2209
        %s2220 = sand.u32 %s141, 1
        %s2221 = scalar_lea.sflag [#allocation5], %s2220
        %s2222 = sand.u32 %s141, 1
        %s2223 = smul.addr %s2222, 80
        %s2224 = scalar_lea.vmem [#allocation9], %s2223
        // Predicated region
        $region53: #{tpu_custom_call.1} parent=39 // pred_check
          %p2225 = pneg %p151
        $region54: #{tpu_custom_call.1} parent=39 // pred_check_branch
          %2227 = sbr.rel (%p2225) target = $region56
        $region55: #{tpu_custom_call.1} parent=39 // pred_region
          %2229 = vsyncadd %s2221, 0
          %s2230 = smul.addr %s23, 10
          %s2231 = smul.addr %s2230, 8
          %s2232 = scalar_lea.hbm %s5, %s2231
          %s2233 = sshll.u32 %s2224, 4
          %s2234 = int_to_ptr.vmem [resolvable:$true] %s2233
          %s2235 = sshll.u32 %s2232, 4
          %s2236 = int_to_ptr.hbm [resolvable:$true] %s2235
          %2241 = dma.vmem_to_hbm [thread:$0]  %s2234, 1280, %s2236, %s2221, 128, 128, 8
        $region56: #{tpu_custom_call.1} parent=39 // pred_fallthru
          _
      $region40: #{tpu_custom_call.1} parent=5 // pred_fallthru
        _
      %p2242 = scmp.le.s32.totalorder 2, %s18
      // Predicated region
      $region57: #{tpu_custom_call.1} parent=5 // pred_check
        %p2243 = pneg %p2242
      $region58: #{tpu_custom_call.1} parent=5 // pred_check_branch
        %2245 = sbr.rel (%p2243) target = $region60
      $region59: #{tpu_custom_call.1} parent=5 // pred_region
        %s2246 = ssub.s32 %s18, 2
        // Predicated region
        $region61: #{tpu_custom_call.1} parent=59 // pred_check
          %p2247 = pneg %p157
        $region62: #{tpu_custom_call.1} parent=59 // pred_check_branch
          %2249 = sbr.rel (%p2247) target = $region64
        $region63: #{tpu_custom_call.1} parent=59 // pred_region
          %s2250 = sand.u32 %s142, 1
          %s2251 = scalar_lea.sflag [#allocation5], %s2250
          %s2252 = sand.u32 %s142, 1
          %s2253 = smul.addr %s2252, 80
          %s2254 = scalar_lea.vmem [#allocation9], %s2253
          %2256 = dma.done %s2251, 1280
        $region64: #{tpu_custom_call.1} parent=59 // pred_fallthru
          _
      $region60: #{tpu_custom_call.1} parent=5 // pred_fallthru
        _
    $region6: #{tpu_custom_call.1} parent=1 // loop_footer
      %s22 = sadd.s32 1, %s18
    $region7: #{tpu_custom_call.1} parent=1 // loop_footer_branch
      %17 = sbr.rel target = $region3
    $region8: #{tpu_custom_call.1} parent=1 // loop_exit
      _
    %2257 = vsyncpa [#allocation4], 1
    %s2258 = scalar_lea.sflag [#allocation4], 1
    %2259 = vsyncpa %s2258, 1
    %2260 = vsyncpa [#allocation7], 1
    %2261 = vsyncpa [#allocation5], 1
    %s2262 = scalar_lea.sflag [#allocation5], 1
    %2263 = vsyncpa %s2262, 1

</llo_original>
